<compile_context>
chip_gen: v5e
topology: v5e:2x2
jax: 0.10.0
libtpu: 0.0.40
codegen_flags: <defaults>
</compile_context>

<pallas_src>
import functools

import jax
import jax.numpy as jnp
from jax import lax
from jax.experimental import pallas as pl
from jax.experimental.pallas import tpu as pltpu


def _lstm_kernel(x_ref, wih_ref, whh_ref, b_ref, wfc_ref, bfc_ref,
                 out_ref, readout_ref, xg_ref, *, seq_len, batch, hp):
    T, B, Hp = seq_len, batch, hp

    # ---- phase 0: whole-sequence input projection (one MXU op), staged in
    # an explicit VMEM scratch so no huge SSA value stays live. --------------
    xg_ref[...] = (jnp.dot(x_ref[...], wih_ref[...],
                           preferred_element_type=jnp.float32)
                   + b_ref[...])                                 # (T*B, 4Hp)

    whh = whh_ref[...]                                           # (Hp, 4Hp)

    h = jnp.zeros((B, Hp), jnp.float32)
    c = jnp.zeros((B, Hp), jnp.float32)

    # ---- serial recurrence (fully unrolled; static, lane-aligned slices) ---
    for t in range(T):
        gates = (xg_ref[t * B:(t + 1) * B, :]
                 + jnp.dot(h.astype(whh.dtype), whh,
                           preferred_element_type=jnp.float32))   # (B, 4Hp)
        # Gate order was permuted in the wrapper to [i, f, o, g]; each block
        # is Hp (a multiple of 128) lanes wide, so all slices are lane-aligned.
        sig = jax.nn.sigmoid(gates[:, :3 * Hp])   # one EUP launch for i, f, o
        g_g = jnp.tanh(gates[:, 3 * Hp:])         # one EUP launch for g
        i_g = sig[:, 0 * Hp:1 * Hp]
        f_g = sig[:, 1 * Hp:2 * Hp]
        o_g = sig[:, 2 * Hp:3 * Hp]

        c = f_g * c + i_g * g_g
        h = o_g * jnp.tanh(c)
        # Lane-aligned per-step store into the VMEM-resident output block;
        # the HBM writeback still happens once at kernel end.
        out_ref[:, t * Hp:(t + 1) * Hp] = h.astype(out_ref.dtype)

    # Readout heads fused into one lane-dense (Hp, RCp) matmul on the final h.
    readout_ref[...] = (
        jnp.dot(h.astype(wfc_ref.dtype), wfc_ref[...],
                preferred_element_type=jnp.float32)
        + bfc_ref[...]).astype(readout_ref.dtype)


def _round_up(x, m):
    return ((x + m - 1) // m) * m


def lstm_custom_forward(data, params, *, hidden_size, num_classes,
                        num_readout_heads, mxu_dtype=jnp.bfloat16):
    """Forward of LSTM_custom (default flags): returns (output, readout_list).

    data: (B, T, I) float32, batch-first (same as the PyTorch module).
    output: (B, T, H); readout_list: list of (B, num_classes), one per head.
    """
    B, T, I = data.shape
    H = hidden_size
    NC = num_classes
    R = num_readout_heads
    Hp = _round_up(H, 128)           # per-gate width, lane-aligned
    RCp = _round_up(R * NC, 128)     # lane-dense fused-readout width

    def _pad_axis(x, target, axis):
        pad = target - x.shape[axis]
        if pad == 0:
            return x
        cfg = [(0, 0)] * x.ndim
        cfg[axis] = (0, pad)
        return jnp.pad(x, cfg)

    def _perm_pad_gates_T(w, k_pad=None):
        # w: (4H, K) packed [i; f; g; o] (PyTorch order).  Returns (Kp, 4Hp)
        # with gate order [i, f, o, g], each gate zero-padded H -> Hp lanes.
        i, f, g, o = jnp.split(w, 4, axis=0)
        blocks = []
        for blk in (i, f, o, g):
            blk_T = blk.T                                   # (K, H)
            if k_pad is not None:
                blk_T = _pad_axis(blk_T, k_pad, 0)
            blocks.append(_pad_axis(blk_T, Hp, 1))
        return jnp.concatenate(blocks, axis=1)

    def _perm_pad_bias(b):
        i, f, g, o = jnp.split(b, 4, axis=0)
        return jnp.concatenate([_pad_axis(x, Hp, 0) for x in (i, f, o, g)],
                               axis=0)

    wih_T = _perm_pad_gates_T(params["w_ih"]).astype(mxu_dtype)          # (I, 4Hp)
    whh_T = _perm_pad_gates_T(params["w_hh"], k_pad=Hp).astype(mxu_dtype)  # (Hp, 4Hp)
    b = _perm_pad_bias(params["b_ih"] + params["b_hh"]
                       ).reshape(1, 4 * Hp).astype(jnp.float32)          # (1, 4Hp)

    # Stack all readout heads into one lane-dense (Hp, RCp) matrix.
    wfc_T = _pad_axis(
        _pad_axis(jnp.concatenate([w.T for w in params["fc_w"]], axis=1),
                  Hp, 0), RCp, 1).astype(mxu_dtype)                      # (Hp, RCp)
    bfc = _pad_axis(jnp.concatenate(params["fc_b"], axis=0),
                    RCp, 0).reshape(1, RCp).astype(jnp.float32)          # (1, RCp)

    # Time-major flatten so the whole-sequence input projection is one matmul
    # and the per-step slab is rows [t*B:(t+1)*B].
    # TODO(synk): for large T*B*I feed T-chunk blocks via a BlockSpec grid so
    # the DMA does the layout change instead of this wrapper-side transpose.
    x2d = jnp.transpose(data, (1, 0, 2)).reshape(T * B, I).astype(mxu_dtype)

    kernel = functools.partial(_lstm_kernel, seq_len=T, batch=B, hp=Hp)

    # Explicit VMEM budget (v5e scoped default is only 16 MiB).
    isz = jnp.dtype(mxu_dtype).itemsize
    vmem_bytes = (T * B * I * isz + I * 4 * Hp * isz + Hp * 4 * Hp * isz
                  + 4 * Hp * 4 + Hp * RCp * isz + RCp * 4
                  + B * T * Hp * 4 + B * RCp * 4 + T * B * 4 * Hp * 4)
    vmem_limit = int(min(max(4 * vmem_bytes, 16 * 2 ** 20), 64 * 2 ** 20))

    out_flat, readout_flat = pl.pallas_call(
        kernel,
        out_shape=(
            jax.ShapeDtypeStruct((B, T * Hp), jnp.float32),
            jax.ShapeDtypeStruct((B, RCp), jnp.float32),
        ),
        in_specs=[pl.BlockSpec(memory_space=pltpu.MemorySpace.VMEM)] * 6,
        out_specs=(
            pl.BlockSpec(memory_space=pltpu.MemorySpace.VMEM),
            pl.BlockSpec(memory_space=pltpu.MemorySpace.VMEM),
        ),
        scratch_shapes=[pltpu.VMEM((T * B, 4 * Hp), jnp.float32)],
        compiler_params=pltpu.CompilerParams(vmem_limit_bytes=vmem_limit),
    )(x2d, wih_T, whh_T, b, wfc_T, bfc)

    output = out_flat.reshape(B, T, Hp)[:, :, :H]     # batch-first (B, T, H)
    readouts = [readout_flat[:, r * NC:(r + 1) * NC] for r in range(R)]
    return output, readouts


def _reference_forward(data, params, *, hidden_size, mxu_dtype=jnp.bfloat16):
    """Pure-JAX reference (lax.scan LSTM, PyTorch gate order i,f,g,o).

    Mirrors the kernel's precision policy: bf16 matmul operands, f32
    accumulation, f32 elementwise/state math.
    """
    B, T, I = data.shape
    H = hidden_size
    w_ih = params["w_ih"].astype(mxu_dtype)
    w_hh = params["w_hh"].astype(mxu_dtype)
    b = (params["b_ih"] + params["b_hh"]).astype(jnp.float32)

    def step(carry, x_t):
        h, c = carry
        gates = (jnp.dot(x_t.astype(mxu_dtype), w_ih.T,
                         preferred_element_type=jnp.float32)
                 + jnp.dot(h.astype(mxu_dtype), w_hh.T,
                           preferred_element_type=jnp.float32)
                 + b)
        i_g = jax.nn.sigmoid(gates[:, 0 * H:1 * H])
        f_g = jax.nn.sigmoid(gates[:, 1 * H:2 * H])
        g_g = jnp.tanh(gates[:, 2 * H:3 * H])
        o_g = jax.nn.sigmoid(gates[:, 3 * H:4 * H])
        c = f_g * c + i_g * g_g
        h = o_g * jnp.tanh(c)
        return (h, c), h

    h0 = jnp.zeros((B, H), jnp.float32)
    c0 = jnp.zeros((B, H), jnp.float32)
    _, hs = lax.scan(step, (h0, c0), jnp.transpose(data, (1, 0, 2)))
    output = jnp.transpose(hs, (1, 0, 2))
    readouts = [jnp.dot(output[:, -1, :].astype(mxu_dtype),
                        w.T.astype(mxu_dtype),
                        preferred_element_type=jnp.float32) + bb
                for w, bb in zip(params["fc_w"], params["fc_b"])]
    return output, readouts


if __name__ == "__main__":
    # Small shapes consistent with the module's forward:
    B, T, I = 2, 8, 4          # batch, sequence length, input features
    H, NC, R = 32, 2, 2        # hidden size, num_classes, num_readout_heads

    key = jax.random.PRNGKey(0)
    ks = jax.random.split(key, 6 + 2 * R)
    bound = 1.0 / jnp.sqrt(jnp.float32(H))   # PyTorch-style uniform init range

    params = {
        "w_ih": jax.random.uniform(ks[0], (4 * H, I), jnp.float32, -bound, bound),
        "w_hh": jax.random.uniform(ks[1], (4 * H, H), jnp.float32, -bound, bound),
        "b_ih": jax.random.uniform(ks[2], (4 * H,), jnp.float32, -bound, bound),
        "b_hh": jax.random.uniform(ks[3], (4 * H,), jnp.float32, -bound, bound),
        "fc_w": [jax.random.uniform(ks[4 + 2 * r], (NC, H), jnp.float32, -bound, bound)
                 for r in range(R)],
        "fc_b": [jax.random.uniform(ks[5 + 2 * r], (NC,), jnp.float32, -bound, bound)
                 for r in range(R)],
    }

    data = jax.random.normal(jax.random.PRNGKey(1), (B, T, I), jnp.float32)

    output, readouts = lstm_custom_forward(
        data, params, hidden_size=H, num_classes=NC, num_readout_heads=R)
    output = jax.block_until_ready(output)
    readouts = [jax.block_until_ready(r) for r in readouts]

    ref_out, ref_readouts = _reference_forward(data, params, hidden_size=H)
    assert output.shape == (B, T, H)
    assert all(r.shape == (B, NC) for r in readouts)
    assert jnp.allclose(output, ref_out, atol=1e-4, rtol=1e-4)
    for r, rr in zip(readouts, ref_readouts):
        assert jnp.allclose(r, rr, atol=1e-4, rtol=1e-4)

    print("KERNEL_OK")
</pallas_src>

<mosaic_0001>
module attributes {stable_mosaic.version = 11 : i64} {
  func.func @_lstm_kernel(%arg0: memref<16x4xbf16, #tpu.memory_space<vmem>>, %arg1: memref<4x512xbf16, #tpu.memory_space<vmem>>, %arg2: memref<128x512xbf16, #tpu.memory_space<vmem>>, %arg3: memref<1x512xf32, #tpu.memory_space<vmem>>, %arg4: memref<128x128xbf16, #tpu.memory_space<vmem>>, %arg5: memref<1x128xf32, #tpu.memory_space<vmem>>, %arg6: memref<2x1024xf32, #tpu.memory_space<vmem>>, %arg7: memref<2x128xf32, #tpu.memory_space<vmem>>, %arg8: memref<16x512xf32, #tpu.memory_space<vmem>>) attributes {dimension_semantics = [], scalar_prefetch = 0 : i64, scratch_operands = 1 : i64, tpu.core_type = #tpu.core_type<tc>} {
    %c0 = arith.constant 0 : index
    %c0_0 = arith.constant 0 : index
    %0 = vector.load %arg0[%c0, %c0_0] : memref<16x4xbf16, #tpu.memory_space<vmem>>, vector<16x4xbf16>
    %c0_1 = arith.constant 0 : index
    %c0_2 = arith.constant 0 : index
    %1 = vector.load %arg1[%c0_1, %c0_2] : memref<4x512xbf16, #tpu.memory_space<vmem>>, vector<4x512xbf16>
    %cst = arith.constant dense<0.000000e+00> : vector<16x512xf32>
    %2 = tpu.matmul %0, %1, %cst {dimension_numbers = #tpu.dot_dimension_numbers<[1], [0], [0], [1], [0, 0, 1, 1], [], []>} : vector<16x4xbf16>, vector<4x512xbf16>, vector<16x512xf32> -> vector<16x512xf32>
    %c0_3 = arith.constant 0 : index
    %c0_4 = arith.constant 0 : index
    %3 = vector.load %arg3[%c0_3, %c0_4] : memref<1x512xf32, #tpu.memory_space<vmem>>, vector<1x512xf32>
    %4 = vector.broadcast %3 : vector<1x512xf32> to vector<16x512xf32>
    %5 = arith.addf %2, %4 : vector<16x512xf32>
    %c0_5 = arith.constant 0 : index
    %c0_6 = arith.constant 0 : index
    %6 = vector.load %arg8[%c0_5, %c0_6] : memref<16x512xf32, #tpu.memory_space<vmem>>, vector<16x512xf32>
    tpu.vector_store %arg8[%c0_5, %c0_6], %5 {strides = array<i32>} : memref<16x512xf32, #tpu.memory_space<vmem>>, vector<16x512xf32>,
    %c0_7 = arith.constant 0 : index
    %c0_8 = arith.constant 0 : index
    %7 = vector.load %arg2[%c0_7, %c0_8] : memref<128x512xbf16, #tpu.memory_space<vmem>>, vector<128x512xbf16>
    %cst_9 = arith.constant 0.000000e+00 : f32
    %8 = vector.broadcast %cst_9 : f32 to vector<2x128xf32>
    %cst_10 = arith.constant 0.000000e+00 : f32
    %9 = vector.broadcast %cst_10 : f32 to vector<2x128xf32>
    %c0_11 = arith.constant 0 : index
    %c0_12 = arith.constant 0 : index
    %10 = vector.load %arg8[%c0_11, %c0_12] : memref<16x512xf32, #tpu.memory_space<vmem>>, vector<2x512xf32>
    %11 = arith.truncf %8 : vector<2x128xf32> to vector<2x128xbf16>
    %cst_13 = arith.constant dense<0.000000e+00> : vector<2x512xf32>
    %12 = tpu.matmul %11, %7, %cst_13 {dimension_numbers = #tpu.dot_dimension_numbers<[1], [0], [0], [1], [0, 0, 1, 1], [], []>} : vector<2x128xbf16>, vector<128x512xbf16>, vector<2x512xf32> -> vector<2x512xf32>
    %13 = arith.addf %10, %12 : vector<2x512xf32>
    %14 = vector.extract_strided_slice %13 {offsets = [0, 0], sizes = [2, 384], strides = [1, 1]} : vector<2x512xf32> to vector<2x384xf32>
    %15 = arith.negf %14 : vector<2x384xf32>
    %16 = math.exp %15 : vector<2x384xf32>
    %cst_14 = arith.constant 1.000000e+00 : f32
    %17 = vector.broadcast %cst_14 : f32 to vector<2x384xf32>
    %18 = arith.addf %17, %16 : vector<2x384xf32>
    %19 = arith.divf %17, %18 : vector<2x384xf32>
    %20 = vector.extract_strided_slice %13 {offsets = [0, 384], sizes = [2, 128], strides = [1, 1]} : vector<2x512xf32> to vector<2x128xf32>
    %21 = math.tanh %20 : vector<2x128xf32>
    %22 = vector.extract_strided_slice %19 {offsets = [0, 0], sizes = [2, 128], strides = [1, 1]} : vector<2x384xf32> to vector<2x128xf32>
    %23 = vector.extract_strided_slice %19 {offsets = [0, 128], sizes = [2, 128], strides = [1, 1]} : vector<2x384xf32> to vector<2x128xf32>
    %24 = vector.extract_strided_slice %19 {offsets = [0, 256], sizes = [2, 128], strides = [1, 1]} : vector<2x384xf32> to vector<2x128xf32>
    %25 = arith.mulf %23, %9 : vector<2x128xf32>
    %26 = arith.mulf %22, %21 : vector<2x128xf32>
    %27 = arith.addf %25, %26 : vector<2x128xf32>
    %28 = math.tanh %27 : vector<2x128xf32>
    %29 = arith.mulf %24, %28 : vector<2x128xf32>
    %c0_15 = arith.constant 0 : index
    %c0_16 = arith.constant 0 : index
    %30 = vector.load %arg6[%c0_15, %c0_16] : memref<2x1024xf32, #tpu.memory_space<vmem>>, vector<2x128xf32>
    tpu.vector_store %arg6[%c0_15, %c0_16], %29 {strides = array<i32>} : memref<2x1024xf32, #tpu.memory_space<vmem>>, vector<2x128xf32>,
    %c2 = arith.constant 2 : index
    %c0_17 = arith.constant 0 : index
    %31 = vector.load %arg8[%c2, %c0_17] : memref<16x512xf32, #tpu.memory_space<vmem>>, vector<2x512xf32>
    %32 = arith.truncf %29 : vector<2x128xf32> to vector<2x128xbf16>
    %cst_18 = arith.constant dense<0.000000e+00> : vector<2x512xf32>
    %33 = tpu.matmul %32, %7, %cst_18 {dimension_numbers = #tpu.dot_dimension_numbers<[1], [0], [0], [1], [0, 0, 1, 1], [], []>} : vector<2x128xbf16>, vector<128x512xbf16>, vector<2x512xf32> -> vector<2x512xf32>
    %34 = arith.addf %31, %33 : vector<2x512xf32>
    %35 = vector.extract_strided_slice %34 {offsets = [0, 0], sizes = [2, 384], strides = [1, 1]} : vector<2x512xf32> to vector<2x384xf32>
    %36 = arith.negf %35 : vector<2x384xf32>
    %37 = math.exp %36 : vector<2x384xf32>
    %cst_19 = arith.constant 1.000000e+00 : f32
    %38 = vector.broadcast %cst_19 : f32 to vector<2x384xf32>
    %39 = arith.addf %38, %37 : vector<2x384xf32>
    %40 = arith.divf %38, %39 : vector<2x384xf32>
    %41 = vector.extract_strided_slice %34 {offsets = [0, 384], sizes = [2, 128], strides = [1, 1]} : vector<2x512xf32> to vector<2x128xf32>
    %42 = math.tanh %41 : vector<2x128xf32>
    %43 = vector.extract_strided_slice %40 {offsets = [0, 0], sizes = [2, 128], strides = [1, 1]} : vector<2x384xf32> to vector<2x128xf32>
    %44 = vector.extract_strided_slice %40 {offsets = [0, 128], sizes = [2, 128], strides = [1, 1]} : vector<2x384xf32> to vector<2x128xf32>
    %45 = vector.extract_strided_slice %40 {offsets = [0, 256], sizes = [2, 128], strides = [1, 1]} : vector<2x384xf32> to vector<2x128xf32>
    %46 = arith.mulf %44, %27 : vector<2x128xf32>
    %47 = arith.mulf %43, %42 : vector<2x128xf32>
    %48 = arith.addf %46, %47 : vector<2x128xf32>
    %49 = math.tanh %48 : vector<2x128xf32>
    %50 = arith.mulf %45, %49 : vector<2x128xf32>
    %c0_20 = arith.constant 0 : index
    %c128 = arith.constant 128 : index
    %51 = vector.load %arg6[%c0_20, %c128] : memref<2x1024xf32, #tpu.memory_space<vmem>>, vector<2x128xf32>
    tpu.vector_store %arg6[%c0_20, %c128], %50 {strides = array<i32>} : memref<2x1024xf32, #tpu.memory_space<vmem>>, vector<2x128xf32>,
    %c4 = arith.constant 4 : index
    %c0_21 = arith.constant 0 : index
    %52 = vector.load %arg8[%c4, %c0_21] : memref<16x512xf32, #tpu.memory_space<vmem>>, vector<2x512xf32>
    %53 = arith.truncf %50 : vector<2x128xf32> to vector<2x128xbf16>
    %cst_22 = arith.constant dense<0.000000e+00> : vector<2x512xf32>
    %54 = tpu.matmul %53, %7, %cst_22 {dimension_numbers = #tpu.dot_dimension_numbers<[1], [0], [0], [1], [0, 0, 1, 1], [], []>} : vector<2x128xbf16>, vector<128x512xbf16>, vector<2x512xf32> -> vector<2x512xf32>
    %55 = arith.addf %52, %54 : vector<2x512xf32>
    %56 = vector.extract_strided_slice %55 {offsets = [0, 0], sizes = [2, 384], strides = [1, 1]} : vector<2x512xf32> to vector<2x384xf32>
    %57 = arith.negf %56 : vector<2x384xf32>
    %58 = math.exp %57 : vector<2x384xf32>
    %cst_23 = arith.constant 1.000000e+00 : f32
    %59 = vector.broadcast %cst_23 : f32 to vector<2x384xf32>
    %60 = arith.addf %59, %58 : vector<2x384xf32>
    %61 = arith.divf %59, %60 : vector<2x384xf32>
    %62 = vector.extract_strided_slice %55 {offsets = [0, 384], sizes = [2, 128], strides = [1, 1]} : vector<2x512xf32> to vector<2x128xf32>
    %63 = math.tanh %62 : vector<2x128xf32>
    %64 = vector.extract_strided_slice %61 {offsets = [0, 0], sizes = [2, 128], strides = [1, 1]} : vector<2x384xf32> to vector<2x128xf32>
    %65 = vector.extract_strided_slice %61 {offsets = [0, 128], sizes = [2, 128], strides = [1, 1]} : vector<2x384xf32> to vector<2x128xf32>
    %66 = vector.extract_strided_slice %61 {offsets = [0, 256], sizes = [2, 128], strides = [1, 1]} : vector<2x384xf32> to vector<2x128xf32>
    %67 = arith.mulf %65, %48 : vector<2x128xf32>
    %68 = arith.mulf %64, %63 : vector<2x128xf32>
    %69 = arith.addf %67, %68 : vector<2x128xf32>
    %70 = math.tanh %69 : vector<2x128xf32>
    %71 = arith.mulf %66, %70 : vector<2x128xf32>
    %c0_24 = arith.constant 0 : index
    %c256 = arith.constant 256 : index
    %72 = vector.load %arg6[%c0_24, %c256] : memref<2x1024xf32, #tpu.memory_space<vmem>>, vector<2x128xf32>
    tpu.vector_store %arg6[%c0_24, %c256], %71 {strides = array<i32>} : memref<2x1024xf32, #tpu.memory_space<vmem>>, vector<2x128xf32>,
    %c6 = arith.constant 6 : index
    %c0_25 = arith.constant 0 : index
    %73 = vector.load %arg8[%c6, %c0_25] : memref<16x512xf32, #tpu.memory_space<vmem>>, vector<2x512xf32>
    %74 = arith.truncf %71 : vector<2x128xf32> to vector<2x128xbf16>
    %cst_26 = arith.constant dense<0.000000e+00> : vector<2x512xf32>
    %75 = tpu.matmul %74, %7, %cst_26 {dimension_numbers = #tpu.dot_dimension_numbers<[1], [0], [0], [1], [0, 0, 1, 1], [], []>} : vector<2x128xbf16>, vector<128x512xbf16>, vector<2x512xf32> -> vector<2x512xf32>
    %76 = arith.addf %73, %75 : vector<2x512xf32>
    %77 = vector.extract_strided_slice %76 {offsets = [0, 0], sizes = [2, 384], strides = [1, 1]} : vector<2x512xf32> to vector<2x384xf32>
    %78 = arith.negf %77 : vector<2x384xf32>
    %79 = math.exp %78 : vector<2x384xf32>
    %cst_27 = arith.constant 1.000000e+00 : f32
    %80 = vector.broadcast %cst_27 : f32 to vector<2x384xf32>
    %81 = arith.addf %80, %79 : vector<2x384xf32>
    %82 = arith.divf %80, %81 : vector<2x384xf32>
    %83 = vector.extract_strided_slice %76 {offsets = [0, 384], sizes = [2, 128], strides = [1, 1]} : vector<2x512xf32> to vector<2x128xf32>
    %84 = math.tanh %83 : vector<2x128xf32>
    %85 = vector.extract_strided_slice %82 {offsets = [0, 0], sizes = [2, 128], strides = [1, 1]} : vector<2x384xf32> to vector<2x128xf32>
    %86 = vector.extract_strided_slice %82 {offsets = [0, 128], sizes = [2, 128], strides = [1, 1]} : vector<2x384xf32> to vector<2x128xf32>
    %87 = vector.extract_strided_slice %82 {offsets = [0, 256], sizes = [2, 128], strides = [1, 1]} : vector<2x384xf32> to vector<2x128xf32>
    %88 = arith.mulf %86, %69 : vector<2x128xf32>
    %89 = arith.mulf %85, %84 : vector<2x128xf32>
    %90 = arith.addf %88, %89 : vector<2x128xf32>
    %91 = math.tanh %90 : vector<2x128xf32>
    %92 = arith.mulf %87, %91 : vector<2x128xf32>
    %c0_28 = arith.constant 0 : index
    %c384 = arith.constant 384 : index
    %93 = vector.load %arg6[%c0_28, %c384] : memref<2x1024xf32, #tpu.memory_space<vmem>>, vector<2x128xf32>
    tpu.vector_store %arg6[%c0_28, %c384], %92 {strides = array<i32>} : memref<2x1024xf32, #tpu.memory_space<vmem>>, vector<2x128xf32>,
    %c8 = arith.constant 8 : index
    %c0_29 = arith.constant 0 : index
    %94 = vector.load %arg8[%c8, %c0_29] : memref<16x512xf32, #tpu.memory_space<vmem>>, vector<2x512xf32>
    %95 = arith.truncf %92 : vector<2x128xf32> to vector<2x128xbf16>
    %cst_30 = arith.constant dense<0.000000e+00> : vector<2x512xf32>
    %96 = tpu.matmul %95, %7, %cst_30 {dimension_numbers = #tpu.dot_dimension_numbers<[1], [0], [0], [1], [0, 0, 1, 1], [], []>} : vector<2x128xbf16>, vector<128x512xbf16>, vector<2x512xf32> -> vector<2x512xf32>
    %97 = arith.addf %94, %96 : vector<2x512xf32>
    %98 = vector.extract_strided_slice %97 {offsets = [0, 0], sizes = [2, 384], strides = [1, 1]} : vector<2x512xf32> to vector<2x384xf32>
    %99 = arith.negf %98 : vector<2x384xf32>
    %100 = math.exp %99 : vector<2x384xf32>
    %cst_31 = arith.constant 1.000000e+00 : f32
    %101 = vector.broadcast %cst_31 : f32 to vector<2x384xf32>
    %102 = arith.addf %101, %100 : vector<2x384xf32>
    %103 = arith.divf %101, %102 : vector<2x384xf32>
    %104 = vector.extract_strided_slice %97 {offsets = [0, 384], sizes = [2, 128], strides = [1, 1]} : vector<2x512xf32> to vector<2x128xf32>
    %105 = math.tanh %104 : vector<2x128xf32>
    %106 = vector.extract_strided_slice %103 {offsets = [0, 0], sizes = [2, 128], strides = [1, 1]} : vector<2x384xf32> to vector<2x128xf32>
    %107 = vector.extract_strided_slice %103 {offsets = [0, 128], sizes = [2, 128], strides = [1, 1]} : vector<2x384xf32> to vector<2x128xf32>
    %108 = vector.extract_strided_slice %103 {offsets = [0, 256], sizes = [2, 128], strides = [1, 1]} : vector<2x384xf32> to vector<2x128xf32>
    %109 = arith.mulf %107, %90 : vector<2x128xf32>
    %110 = arith.mulf %106, %105 : vector<2x128xf32>
    %111 = arith.addf %109, %110 : vector<2x128xf32>
    %112 = math.tanh %111 : vector<2x128xf32>
    %113 = arith.mulf %108, %112 : vector<2x128xf32>
    %c0_32 = arith.constant 0 : index
    %c512 = arith.constant 512 : index
    %114 = vector.load %arg6[%c0_32, %c512] : memref<2x1024xf32, #tpu.memory_space<vmem>>, vector<2x128xf32>
    tpu.vector_store %arg6[%c0_32, %c512], %113 {strides = array<i32>} : memref<2x1024xf32, #tpu.memory_space<vmem>>, vector<2x128xf32>,
    %c10 = arith.constant 10 : index
    %c0_33 = arith.constant 0 : index
    %115 = vector.load %arg8[%c10, %c0_33] : memref<16x512xf32, #tpu.memory_space<vmem>>, vector<2x512xf32>
    %116 = arith.truncf %113 : vector<2x128xf32> to vector<2x128xbf16>
    %cst_34 = arith.constant dense<0.000000e+00> : vector<2x512xf32>
    %117 = tpu.matmul %116, %7, %cst_34 {dimension_numbers = #tpu.dot_dimension_numbers<[1], [0], [0], [1], [0, 0, 1, 1], [], []>} : vector<2x128xbf16>, vector<128x512xbf16>, vector<2x512xf32> -> vector<2x512xf32>
    %118 = arith.addf %115, %117 : vector<2x512xf32>
    %119 = vector.extract_strided_slice %118 {offsets = [0, 0], sizes = [2, 384], strides = [1, 1]} : vector<2x512xf32> to vector<2x384xf32>
    %120 = arith.negf %119 : vector<2x384xf32>
    %121 = math.exp %120 : vector<2x384xf32>
    %cst_35 = arith.constant 1.000000e+00 : f32
    %122 = vector.broadcast %cst_35 : f32 to vector<2x384xf32>
    %123 = arith.addf %122, %121 : vector<2x384xf32>
    %124 = arith.divf %122, %123 : vector<2x384xf32>
    %125 = vector.extract_strided_slice %118 {offsets = [0, 384], sizes = [2, 128], strides = [1, 1]} : vector<2x512xf32> to vector<2x128xf32>
    %126 = math.tanh %125 : vector<2x128xf32>
    %127 = vector.extract_strided_slice %124 {offsets = [0, 0], sizes = [2, 128], strides = [1, 1]} : vector<2x384xf32> to vector<2x128xf32>
    %128 = vector.extract_strided_slice %124 {offsets = [0, 128], sizes = [2, 128], strides = [1, 1]} : vector<2x384xf32> to vector<2x128xf32>
    %129 = vector.extract_strided_slice %124 {offsets = [0, 256], sizes = [2, 128], strides = [1, 1]} : vector<2x384xf32> to vector<2x128xf32>
    %130 = arith.mulf %128, %111 : vector<2x128xf32>
    %131 = arith.mulf %127, %126 : vector<2x128xf32>
    %132 = arith.addf %130, %131 : vector<2x128xf32>
    %133 = math.tanh %132 : vector<2x128xf32>
    %134 = arith.mulf %129, %133 : vector<2x128xf32>
    %c0_36 = arith.constant 0 : index
    %c640 = arith.constant 640 : index
    %135 = vector.load %arg6[%c0_36, %c640] : memref<2x1024xf32, #tpu.memory_space<vmem>>, vector<2x128xf32>
    tpu.vector_store %arg6[%c0_36, %c640], %134 {strides = array<i32>} : memref<2x1024xf32, #tpu.memory_space<vmem>>, vector<2x128xf32>,
    %c12 = arith.constant 12 : index
    %c0_37 = arith.constant 0 : index
    %136 = vector.load %arg8[%c12, %c0_37] : memref<16x512xf32, #tpu.memory_space<vmem>>, vector<2x512xf32>
    %137 = arith.truncf %134 : vector<2x128xf32> to vector<2x128xbf16>
    %cst_38 = arith.constant dense<0.000000e+00> : vector<2x512xf32>
    %138 = tpu.matmul %137, %7, %cst_38 {dimension_numbers = #tpu.dot_dimension_numbers<[1], [0], [0], [1], [0, 0, 1, 1], [], []>} : vector<2x128xbf16>, vector<128x512xbf16>, vector<2x512xf32> -> vector<2x512xf32>
    %139 = arith.addf %136, %138 : vector<2x512xf32>
    %140 = vector.extract_strided_slice %139 {offsets = [0, 0], sizes = [2, 384], strides = [1, 1]} : vector<2x512xf32> to vector<2x384xf32>
    %141 = arith.negf %140 : vector<2x384xf32>
    %142 = math.exp %141 : vector<2x384xf32>
    %cst_39 = arith.constant 1.000000e+00 : f32
    %143 = vector.broadcast %cst_39 : f32 to vector<2x384xf32>
    %144 = arith.addf %143, %142 : vector<2x384xf32>
    %145 = arith.divf %143, %144 : vector<2x384xf32>
    %146 = vector.extract_strided_slice %139 {offsets = [0, 384], sizes = [2, 128], strides = [1, 1]} : vector<2x512xf32> to vector<2x128xf32>
    %147 = math.tanh %146 : vector<2x128xf32>
    %148 = vector.extract_strided_slice %145 {offsets = [0, 0], sizes = [2, 128], strides = [1, 1]} : vector<2x384xf32> to vector<2x128xf32>
    %149 = vector.extract_strided_slice %145 {offsets = [0, 128], sizes = [2, 128], strides = [1, 1]} : vector<2x384xf32> to vector<2x128xf32>
    %150 = vector.extract_strided_slice %145 {offsets = [0, 256], sizes = [2, 128], strides = [1, 1]} : vector<2x384xf32> to vector<2x128xf32>
    %151 = arith.mulf %149, %132 : vector<2x128xf32>
    %152 = arith.mulf %148, %147 : vector<2x128xf32>
    %153 = arith.addf %151, %152 : vector<2x128xf32>
    %154 = math.tanh %153 : vector<2x128xf32>
    %155 = arith.mulf %150, %154 : vector<2x128xf32>
    %c0_40 = arith.constant 0 : index
    %c768 = arith.constant 768 : index
    %156 = vector.load %arg6[%c0_40, %c768] : memref<2x1024xf32, #tpu.memory_space<vmem>>, vector<2x128xf32>
    tpu.vector_store %arg6[%c0_40, %c768], %155 {strides = array<i32>} : memref<2x1024xf32, #tpu.memory_space<vmem>>, vector<2x128xf32>,
    %c14 = arith.constant 14 : index
    %c0_41 = arith.constant 0 : index
    %157 = vector.load %arg8[%c14, %c0_41] : memref<16x512xf32, #tpu.memory_space<vmem>>, vector<2x512xf32>
    %158 = arith.truncf %155 : vector<2x128xf32> to vector<2x128xbf16>
    %cst_42 = arith.constant dense<0.000000e+00> : vector<2x512xf32>
    %159 = tpu.matmul %158, %7, %cst_42 {dimension_numbers = #tpu.dot_dimension_numbers<[1], [0], [0], [1], [0, 0, 1, 1], [], []>} : vector<2x128xbf16>, vector<128x512xbf16>, vector<2x512xf32> -> vector<2x512xf32>
    %160 = arith.addf %157, %159 : vector<2x512xf32>
    %161 = vector.extract_strided_slice %160 {offsets = [0, 0], sizes = [2, 384], strides = [1, 1]} : vector<2x512xf32> to vector<2x384xf32>
    %162 = arith.negf %161 : vector<2x384xf32>
    %163 = math.exp %162 : vector<2x384xf32>
    %cst_43 = arith.constant 1.000000e+00 : f32
    %164 = vector.broadcast %cst_43 : f32 to vector<2x384xf32>
    %165 = arith.addf %164, %163 : vector<2x384xf32>
    %166 = arith.divf %164, %165 : vector<2x384xf32>
    %167 = vector.extract_strided_slice %160 {offsets = [0, 384], sizes = [2, 128], strides = [1, 1]} : vector<2x512xf32> to vector<2x128xf32>
    %168 = math.tanh %167 : vector<2x128xf32>
    %169 = vector.extract_strided_slice %166 {offsets = [0, 0], sizes = [2, 128], strides = [1, 1]} : vector<2x384xf32> to vector<2x128xf32>
    %170 = vector.extract_strided_slice %166 {offsets = [0, 128], sizes = [2, 128], strides = [1, 1]} : vector<2x384xf32> to vector<2x128xf32>
    %171 = vector.extract_strided_slice %166 {offsets = [0, 256], sizes = [2, 128], strides = [1, 1]} : vector<2x384xf32> to vector<2x128xf32>
    %172 = arith.mulf %170, %153 : vector<2x128xf32>
    %173 = arith.mulf %169, %168 : vector<2x128xf32>
    %174 = arith.addf %172, %173 : vector<2x128xf32>
    %175 = math.tanh %174 : vector<2x128xf32>
    %176 = arith.mulf %171, %175 : vector<2x128xf32>
    %c0_44 = arith.constant 0 : index
    %c896 = arith.constant 896 : index
    %177 = vector.load %arg6[%c0_44, %c896] : memref<2x1024xf32, #tpu.memory_space<vmem>>, vector<2x128xf32>
    tpu.vector_store %arg6[%c0_44, %c896], %176 {strides = array<i32>} : memref<2x1024xf32, #tpu.memory_space<vmem>>, vector<2x128xf32>,
    %178 = arith.truncf %176 : vector<2x128xf32> to vector<2x128xbf16>
    %c0_45 = arith.constant 0 : index
    %c0_46 = arith.constant 0 : index
    %179 = vector.load %arg4[%c0_45, %c0_46] : memref<128x128xbf16, #tpu.memory_space<vmem>>, vector<128x128xbf16>
    %cst_47 = arith.constant dense<0.000000e+00> : vector<2x128xf32>
    %180 = tpu.matmul %178, %179, %cst_47 {dimension_numbers = #tpu.dot_dimension_numbers<[1], [0], [0], [1], [0, 0, 1, 1], [], []>} : vector<2x128xbf16>, vector<128x128xbf16>, vector<2x128xf32> -> vector<2x128xf32>
    %c0_48 = arith.constant 0 : index
    %c0_49 = arith.constant 0 : index
    %181 = vector.load %arg5[%c0_48, %c0_49] : memref<1x128xf32, #tpu.memory_space<vmem>>, vector<1x128xf32>
    %182 = vector.broadcast %181 : vector<1x128xf32> to vector<2x128xf32>
    %183 = arith.addf %180, %182 : vector<2x128xf32>
    %c0_50 = arith.constant 0 : index
    %c0_51 = arith.constant 0 : index
    %184 = vector.load %arg7[%c0_50, %c0_51] : memref<2x128xf32, #tpu.memory_space<vmem>>, vector<2x128xf32>
    tpu.vector_store %arg7[%c0_50, %c0_51], %183 {strides = array<i32>} : memref<2x128xf32, #tpu.memory_space<vmem>>, vector<2x128xf32>,
    return
  }
}

</mosaic_0001>

<llo_original>
// kernel: tpu_custom_call.1
$region0: #{tpu_custom_call.1}
  #allocation0 [shape = 'u32[]', space=smem, size = 0x4, offset = 0x4, fixed_abs, tag = 'smem constant byte address 0x4 - core index']
  #allocation1 [shape = 'u32[72,128]{1,0:T(1,128)}', space=vmem, size = 0x9000, scoped, tag = 'internal scratch']
  #allocation2 [shape = 'f32[16,512]{1,0:T(8,128)}', space=vmem, size = 0x8000, scoped, tag = 'scratch operand']
  %s0 = inlined_call_operand.vmem [shape: bf16[16,4], index: 0, kind: input, shape index: {}]
  %s1 = inlined_call_operand.vmem [shape: bf16[4,512], index: 1, kind: input, shape index: {}]
  %s2 = inlined_call_operand.hbm [shape: bf16[128,512], index: 2, kind: input, shape index: {}]
  %s3 = inlined_call_operand.vmem [shape: f32[1,512], index: 3, kind: input, shape index: {}]
  %s4 = inlined_call_operand.hbm [shape: bf16[128,128], index: 4, kind: input, shape index: {}]
  %s5 = inlined_call_operand.vmem [shape: f32[1,128], index: 5, kind: input, shape index: {}]
  %s6 = inlined_call_operand.hbm [shape: f32[2,1024], index: 6, kind: output, shape index: {0}]
  %s7 = inlined_call_operand.hbm [shape: f32[2,128], index: 7, kind: output, shape index: {1}]
  %8 = xla_tuple %s6, %s7
  %s9 = sld [smem:[#allocation0]]
  $region50: #{tpu_custom_call.1} parent=0
    _
  %s11 = ssub.s32 1, %s9
  %s12 = scalar_select 0, %s11, %s9
  $region1: #{tpu_custom_call.1} parent=0
    #allocation3 [shape = 'u8[131072]{0}', space=vmem, size = 0x20000, scoped, tag = 'input window, operand 2, single buffered']
    #allocation4 [shape = 's32[1]{0}', space=sflag, size = 0x4, scoped, tag = 'scoped memory for tpu_custom_call.1']
    #allocation5 [shape = 's32[1]{0}', space=sflag, size = 0x4, scoped, tag = 'scoped memory for tpu_custom_call.1']
    #allocation6 [shape = 'u8[32768]{0}', space=vmem, size = 0x8000, scoped, tag = 'input window, operand 4, single buffered']
    #allocation7 [shape = 's32[1]{0}', space=sflag, size = 0x4, scoped, tag = 'scoped memory for tpu_custom_call.1']
    #allocation8 [shape = 'u8[8192]{0}', space=vmem, size = 0x2000, scoped, tag = 'output window, operand 0, single buffered']
    #allocation9 [shape = 'u8[1024]{0}', space=vmem, size = 0x400, scoped, tag = 'output window, operand 1, single buffered']
    #allocation10 [shape = 's32[1]{0}', space=sflag, size = 0x4, scoped, tag = 'scoped memory for tpu_custom_call.1']
    %13 = vsyncpa [#allocation4], 0
    %14 = vsyncpa [#allocation7], 0
    %15 = vsyncpa [#allocation5], 0
    %16 = vsyncpa [#allocation10], 0
    // Predicated region
    $region2: #{tpu_custom_call.1} parent=1 // pred_check
      _
    $region3: #{tpu_custom_call.1} parent=1 // pred_check_branch
      %18 = sbr.rel (0) target = $region5
    $region4: #{tpu_custom_call.1} parent=1 // pred_region
      _
    $region5: #{tpu_custom_call.1} parent=1 // pred_fallthru
      _
    // Predicated region
    $region6: #{tpu_custom_call.1} parent=1 // pred_check
      _
    $region7: #{tpu_custom_call.1} parent=1 // pred_check_branch
      %20 = sbr.rel (0) target = $region9
    $region8: #{tpu_custom_call.1} parent=1 // pred_region
      _
    $region9: #{tpu_custom_call.1} parent=1 // pred_fallthru
      _
    // Predicated region
    $region10: #{tpu_custom_call.1} parent=1 // pred_check
      _
    $region11: #{tpu_custom_call.1} parent=1 // pred_check_branch
      %22 = sbr.rel (0) target = $region13
    $region12: #{tpu_custom_call.1} parent=1 // pred_region
      %24 = vsyncadd [#allocation4], 0
      %s25 = sshll.u32 %s2, 4
      %s26 = int_to_ptr.hbm [resolvable:$true] %s25
      %s27 = sshll.u32 [#allocation3], 4
      %s28 = int_to_ptr.vmem [resolvable:$true] %s27
      %33 = dma.hbm_to_vmem [thread:$0]  %s26, 4096, %s28, [#allocation4], 256, 256, 16
    $region13: #{tpu_custom_call.1} parent=1 // pred_fallthru
      _
    // Predicated region
    $region14: #{tpu_custom_call.1} parent=1 // pred_check
      _
    $region15: #{tpu_custom_call.1} parent=1 // pred_check_branch
      %35 = sbr.rel (0) target = $region17
    $region16: #{tpu_custom_call.1} parent=1 // pred_region
      _
    $region17: #{tpu_custom_call.1} parent=1 // pred_fallthru
      _
    // Predicated region
    $region18: #{tpu_custom_call.1} parent=1 // pred_check
      _
    $region19: #{tpu_custom_call.1} parent=1 // pred_check_branch
      %37 = sbr.rel (0) target = $region21
    $region20: #{tpu_custom_call.1} parent=1 // pred_region
      %39 = vsyncadd [#allocation7], 0
      %s40 = sshll.u32 %s4, 4
      %s41 = int_to_ptr.hbm [resolvable:$true] %s40
      %s42 = sshll.u32 [#allocation6], 4
      %s43 = int_to_ptr.vmem [resolvable:$true] %s42
      %48 = dma.hbm_to_vmem [thread:$0]  %s41, 1024, %s43, [#allocation7], 64, 64, 4
    $region21: #{tpu_custom_call.1} parent=1 // pred_fallthru
      _
    // Predicated region
    $region22: #{tpu_custom_call.1} parent=1 // pred_check
      _
    $region23: #{tpu_custom_call.1} parent=1 // pred_check_branch
      %50 = sbr.rel (0) target = $region25
    $region24: #{tpu_custom_call.1} parent=1 // pred_region
      _
    $region25: #{tpu_custom_call.1} parent=1 // pred_fallthru
      _
    // Predicated region
    $region26: #{tpu_custom_call.1} parent=1 // pred_check
      _
    $region27: #{tpu_custom_call.1} parent=1 // pred_check_branch
      %52 = sbr.rel (0) target = $region29
    $region28: #{tpu_custom_call.1} parent=1 // pred_region
      %54 = dma.done [#allocation4], 4096
    $region29: #{tpu_custom_call.1} parent=1 // pred_fallthru
      _
    // Predicated region
    $region30: #{tpu_custom_call.1} parent=1 // pred_check
      _
    $region31: #{tpu_custom_call.1} parent=1 // pred_check_branch
      %56 = sbr.rel (0) target = $region33
    $region32: #{tpu_custom_call.1} parent=1 // pred_region
      %58 = dma.done [#allocation7], 1024
    $region33: #{tpu_custom_call.1} parent=1 // pred_fallthru
      _
    %v60 = vld [vmem:[%s0] sm:$0xf]
    %v61 = vld [vmem:[%s0 + $0x4] sm:$0xf]
    %v62 = vld [vmem:[%s1] sm:$0xff]
    %v63 = vld [vmem:[%s3] sm:$0xf]
    %v65 = vperm.slane %v63, 0
    %v66 = vperm.slane %v63, 1
    %v67 = vperm.slane %v63, 2
    %v68 = vperm.slane %v63, 3
    %v75 = vunpack.c.l.b16 %v60
    %v76 = vunpack.c.l.b16 %v61
    %v77 = vpack.c.b16 %v76, %v75
    %79 = vst [vmem:[#allocation1] ss:$4 sm:$0xff] %v62
    %v80 = vld.sshfl [vmem:[#allocation1] sm:$0xff pattern:$0x73625140]
    %v81 = vld.sshfl [vmem:[#allocation1 + $0x8] sm:$0xff pattern:$0x73625140]
    %v82 = vld.sshfl [vmem:[#allocation1 + $0x10] sm:$0xff pattern:$0x73625140]
    %v83 = vld.sshfl [vmem:[#allocation1 + $0x18] sm:$0xff pattern:$0x73625140]
    %vm84 = vcmask 31744
    %v86 = vsel %vm84, %v77, 0
    %vm88 = vcmask 1041408
    %v89 = vsel %vm88, %v80, 0
    %v91 = vsel %vm88, %v81, 0
    %v93 = vsel %vm88, %v82, 0
    %v95 = vsel %vm88, %v83, 0
    %97 = vmatpush.bf16.msra.mxu0 0
    %98 = vmatpush.bf16.msra.mxu0 0
    %99 = vmatpush.bf16.msra.mxu0 0
    %100 = vmatpush.bf16.msra.mxu0 0
    %101 = vmatpush.bf16.msra.mxu0 0
    %102 = vmatpush.bf16.msra.mxu0 0
    %103 = vmatpush.bf16.msra.mxu0 0
    %104 = vmatpush.bf16.msra.mxu0 %v89
    %105 = vmatmul.bf16.gmra.mxu0 %v86
    %v106 = vpop.f32.mrf.mxu0
    %v107 = vadd.f32 %v65, %v106
    %v108 = vpop.f32.mrf.mxu0
    %v109 = vadd.f32 %v65, %v108
    %110 = vdwg.mxu0
    %111 = vmatpush.bf16.msra.mxu0 0
    %112 = vmatpush.bf16.msra.mxu0 0
    %113 = vmatpush.bf16.msra.mxu0 0
    %114 = vmatpush.bf16.msra.mxu0 0
    %115 = vmatpush.bf16.msra.mxu0 0
    %116 = vmatpush.bf16.msra.mxu0 0
    %117 = vmatpush.bf16.msra.mxu0 0
    %118 = vmatpush.bf16.msra.mxu0 %v91
    %119 = vmatmul.bf16.gmra.mxu0 %v86
    %v120 = vpop.f32.mrf.mxu0
    %v121 = vadd.f32 %v66, %v120
    %v122 = vpop.f32.mrf.mxu0
    %v123 = vadd.f32 %v66, %v122
    %124 = vdwg.mxu0
    %125 = vmatpush.bf16.msra.mxu0 0
    %126 = vmatpush.bf16.msra.mxu0 0
    %127 = vmatpush.bf16.msra.mxu0 0
    %128 = vmatpush.bf16.msra.mxu0 0
    %129 = vmatpush.bf16.msra.mxu0 0
    %130 = vmatpush.bf16.msra.mxu0 0
    %131 = vmatpush.bf16.msra.mxu0 0
    %132 = vmatpush.bf16.msra.mxu0 %v93
    %133 = vmatmul.bf16.gmra.mxu0 %v86
    %v134 = vpop.f32.mrf.mxu0
    %v135 = vadd.f32 %v67, %v134
    %v136 = vpop.f32.mrf.mxu0
    %v137 = vadd.f32 %v67, %v136
    %138 = vdwg.mxu0
    %139 = vmatpush.bf16.msra.mxu0 0
    %140 = vmatpush.bf16.msra.mxu0 0
    %141 = vmatpush.bf16.msra.mxu0 0
    %142 = vmatpush.bf16.msra.mxu0 0
    %143 = vmatpush.bf16.msra.mxu0 0
    %144 = vmatpush.bf16.msra.mxu0 0
    %145 = vmatpush.bf16.msra.mxu0 0
    %146 = vmatpush.bf16.msra.mxu0 %v95
    %147 = vmatmul.bf16.gmra.mxu0 %v86
    %v148 = vpop.f32.mrf.mxu0
    %v149 = vadd.f32 %v68, %v148
    %v150 = vpop.f32.mrf.mxu0
    %v151 = vadd.f32 %v68, %v150
    %152 = vdwg.mxu0
    %153 = vst [vmem:[#allocation2] sm:$0xff] %v107
    %154 = vst [vmem:[#allocation2 + $0x8] sm:$0xff] %v121
    %155 = vst [vmem:[#allocation2 + $0x10] sm:$0xff] %v135
    %156 = vst [vmem:[#allocation2 + $0x18] sm:$0xff] %v149
    %157 = vst [vmem:[#allocation2 + $0x20] sm:$0xff] %v109
    %158 = vst [vmem:[#allocation2 + $0x28] sm:$0xff] %v123
    %159 = vst [vmem:[#allocation2 + $0x30] sm:$0xff] %v137
    %160 = vst [vmem:[#allocation2 + $0x38] sm:$0xff] %v151
    %v161 = vld [vmem:[#allocation3] sm:$0xff]
    %v162 = vld [vmem:[#allocation3 + $0x8] sm:$0xff]
    %v163 = vld [vmem:[#allocation3 + $0x10] sm:$0xff]
    %v164 = vld [vmem:[#allocation3 + $0x18] sm:$0xff]
    %v165 = vld [vmem:[#allocation3 + $0x20] sm:$0xff]
    %v166 = vld [vmem:[#allocation3 + $0x28] sm:$0xff]
    %v167 = vld [vmem:[#allocation3 + $0x30] sm:$0xff]
    %v168 = vld [vmem:[#allocation3 + $0x38] sm:$0xff]
    %v169 = vld [vmem:[#allocation3 + $0x40] sm:$0xff]
    %v170 = vld [vmem:[#allocation3 + $0x48] sm:$0xff]
    %v171 = vld [vmem:[#allocation3 + $0x50] sm:$0xff]
    %v172 = vld [vmem:[#allocation3 + $0x58] sm:$0xff]
    %v173 = vld [vmem:[#allocation3 + $0x60] sm:$0xff]
    %v174 = vld [vmem:[#allocation3 + $0x68] sm:$0xff]
    %v175 = vld [vmem:[#allocation3 + $0x70] sm:$0xff]
    %v176 = vld [vmem:[#allocation3 + $0x78] sm:$0xff]
    %v177 = vld [vmem:[#allocation3 + $0x80] sm:$0xff]
    %v178 = vld [vmem:[#allocation3 + $0x88] sm:$0xff]
    %v179 = vld [vmem:[#allocation3 + $0x90] sm:$0xff]
    %v180 = vld [vmem:[#allocation3 + $0x98] sm:$0xff]
    %v181 = vld [vmem:[#allocation3 + $0xa0] sm:$0xff]
    %v182 = vld [vmem:[#allocation3 + $0xa8] sm:$0xff]
    %v183 = vld [vmem:[#allocation3 + $0xb0] sm:$0xff]
    %v184 = vld [vmem:[#allocation3 + $0xb8] sm:$0xff]
    %v185 = vld [vmem:[#allocation3 + $0xc0] sm:$0xff]
    %v186 = vld [vmem:[#allocation3 + $0xc8] sm:$0xff]
    %v187 = vld [vmem:[#allocation3 + $0xd0] sm:$0xff]
    %v188 = vld [vmem:[#allocation3 + $0xd8] sm:$0xff]
    %v189 = vld [vmem:[#allocation3 + $0xe0] sm:$0xff]
    %v190 = vld [vmem:[#allocation3 + $0xe8] sm:$0xff]
    %v191 = vld [vmem:[#allocation3 + $0xf0] sm:$0xff]
    %v192 = vld [vmem:[#allocation3 + $0xf8] sm:$0xff]
    %v193 = vld [vmem:[#allocation2] sm:$0x3]
    %v194 = vld [vmem:[#allocation2 + $0x8] sm:$0x3]
    %v195 = vld [vmem:[#allocation2 + $0x10] sm:$0x3]
    %v196 = vld [vmem:[#allocation2 + $0x18] sm:$0x3]
    %v229 = vunpack.c.l.b16 %v161
    %v230 = vunpack.c.h.b16 %v161
    %v231 = vunpack.c.l.b16 %v162
    %v232 = vunpack.c.h.b16 %v162
    %v233 = vunpack.c.l.b16 %v163
    %v234 = vunpack.c.h.b16 %v163
    %v235 = vunpack.c.l.b16 %v164
    %v236 = vunpack.c.h.b16 %v164
    %v237 = vunpack.c.l.b16 %v165
    %v238 = vunpack.c.h.b16 %v165
    %v239 = vunpack.c.l.b16 %v166
    %v240 = vunpack.c.h.b16 %v166
    %v241 = vunpack.c.l.b16 %v167
    %v242 = vunpack.c.h.b16 %v167
    %v243 = vunpack.c.l.b16 %v168
    %v244 = vunpack.c.h.b16 %v168
    %v245 = vunpack.c.l.b16 %v169
    %v246 = vunpack.c.h.b16 %v169
    %v247 = vunpack.c.l.b16 %v170
    %v248 = vunpack.c.h.b16 %v170
    %v249 = vunpack.c.l.b16 %v171
    %v250 = vunpack.c.h.b16 %v171
    %v251 = vunpack.c.l.b16 %v172
    %v252 = vunpack.c.h.b16 %v172
    %v253 = vunpack.c.l.b16 %v173
    %v254 = vunpack.c.h.b16 %v173
    %v255 = vunpack.c.l.b16 %v174
    %v256 = vunpack.c.h.b16 %v174
    %v257 = vunpack.c.l.b16 %v175
    %v258 = vunpack.c.h.b16 %v175
    %v259 = vunpack.c.l.b16 %v176
    %v260 = vunpack.c.h.b16 %v176
    %v261 = vunpack.c.l.b16 %v177
    %v262 = vunpack.c.h.b16 %v177
    %v263 = vunpack.c.l.b16 %v178
    %v264 = vunpack.c.h.b16 %v178
    %v265 = vunpack.c.l.b16 %v179
    %v266 = vunpack.c.h.b16 %v179
    %v267 = vunpack.c.l.b16 %v180
    %v268 = vunpack.c.h.b16 %v180
    %v269 = vunpack.c.l.b16 %v181
    %v270 = vunpack.c.h.b16 %v181
    %v271 = vunpack.c.l.b16 %v182
    %v272 = vunpack.c.h.b16 %v182
    %v273 = vunpack.c.l.b16 %v183
    %v274 = vunpack.c.h.b16 %v183
    %v275 = vunpack.c.l.b16 %v184
    %v276 = vunpack.c.h.b16 %v184
    %v277 = vunpack.c.l.b16 %v185
    %v278 = vunpack.c.h.b16 %v185
    %v279 = vunpack.c.l.b16 %v186
    %v280 = vunpack.c.h.b16 %v186
    %v281 = vunpack.c.l.b16 %v187
    %v282 = vunpack.c.h.b16 %v187
    %v283 = vunpack.c.l.b16 %v188
    %v284 = vunpack.c.h.b16 %v188
    %v285 = vunpack.c.l.b16 %v189
    %v286 = vunpack.c.h.b16 %v189
    %v287 = vunpack.c.l.b16 %v190
    %v288 = vunpack.c.h.b16 %v190
    %v289 = vunpack.c.l.b16 %v191
    %v290 = vunpack.c.h.b16 %v191
    %v291 = vunpack.c.l.b16 %v192
    %v292 = vunpack.c.h.b16 %v192
    %v293 = vpack.c.b16 %v233, %v229
    %v294 = vpack.c.b16 %v234, %v230
    %v295 = vpack.c.b16 %v235, %v231
    %v296 = vpack.c.b16 %v236, %v232
    %v297 = vpack.c.b16 %v241, %v237
    %v298 = vpack.c.b16 %v242, %v238
    %v299 = vpack.c.b16 %v243, %v239
    %v300 = vpack.c.b16 %v244, %v240
    %v301 = vpack.c.b16 %v249, %v245
    %v302 = vpack.c.b16 %v250, %v246
    %v303 = vpack.c.b16 %v251, %v247
    %v304 = vpack.c.b16 %v252, %v248
    %v305 = vpack.c.b16 %v257, %v253
    %v306 = vpack.c.b16 %v258, %v254
    %v307 = vpack.c.b16 %v259, %v255
    %v308 = vpack.c.b16 %v260, %v256
    %v309 = vpack.c.b16 %v265, %v261
    %v310 = vpack.c.b16 %v266, %v262
    %v311 = vpack.c.b16 %v267, %v263
    %v312 = vpack.c.b16 %v268, %v264
    %v313 = vpack.c.b16 %v273, %v269
    %v314 = vpack.c.b16 %v274, %v270
    %v315 = vpack.c.b16 %v275, %v271
    %v316 = vpack.c.b16 %v276, %v272
    %v317 = vpack.c.b16 %v281, %v277
    %v318 = vpack.c.b16 %v282, %v278
    %v319 = vpack.c.b16 %v283, %v279
    %v320 = vpack.c.b16 %v284, %v280
    %v321 = vpack.c.b16 %v289, %v285
    %v322 = vpack.c.b16 %v290, %v286
    %v323 = vpack.c.b16 %v291, %v287
    %v324 = vpack.c.b16 %v292, %v288
    %357 = vmatpush.bf16.msra.mxu0 %v321
    %358 = vmatpush.bf16.msra.mxu0 %v317
    %359 = vmatpush.bf16.msra.mxu0 %v313
    %360 = vmatpush.bf16.msra.mxu0 %v309
    %361 = vmatpush.bf16.msra.mxu0 %v305
    %362 = vmatpush.bf16.msra.mxu0 %v301
    %363 = vmatpush.bf16.msra.mxu0 %v297
    %364 = vmatpush.bf16.msra.mxu0 %v293
    %365 = vmatmul.bf16.gmra.mxu0 0
    %v366 = vpop.f32.mrf.mxu0
    %v367 = vadd.f32 0.0, %v366
    %v368 = vpop.f32.mrf.mxu0
    %369 = vdwg.mxu0
    %370 = vmatpush.bf16.msra.mxu0 %v322
    %371 = vmatpush.bf16.msra.mxu0 %v318
    %372 = vmatpush.bf16.msra.mxu0 %v314
    %373 = vmatpush.bf16.msra.mxu0 %v310
    %374 = vmatpush.bf16.msra.mxu0 %v306
    %375 = vmatpush.bf16.msra.mxu0 %v302
    %376 = vmatpush.bf16.msra.mxu0 %v298
    %377 = vmatpush.bf16.msra.mxu0 %v294
    %378 = vmatmul.bf16.gmra.mxu0 0
    %v379 = vpop.f32.mrf.mxu0
    %v380 = vadd.f32 0.0, %v379
    %v381 = vpop.f32.mrf.mxu0
    %382 = vdwg.mxu0
    %383 = vmatpush.bf16.msra.mxu0 %v323
    %384 = vmatpush.bf16.msra.mxu0 %v319
    %385 = vmatpush.bf16.msra.mxu0 %v315
    %386 = vmatpush.bf16.msra.mxu0 %v311
    %387 = vmatpush.bf16.msra.mxu0 %v307
    %388 = vmatpush.bf16.msra.mxu0 %v303
    %389 = vmatpush.bf16.msra.mxu0 %v299
    %390 = vmatpush.bf16.msra.mxu0 %v295
    %391 = vmatmul.bf16.gmra.mxu0 0
    %v392 = vpop.f32.mrf.mxu0
    %v393 = vadd.f32 0.0, %v392
    %v394 = vpop.f32.mrf.mxu0
    %395 = vdwg.mxu0
    %396 = vmatpush.bf16.msra.mxu0 %v324
    %397 = vmatpush.bf16.msra.mxu0 %v320
    %398 = vmatpush.bf16.msra.mxu0 %v316
    %399 = vmatpush.bf16.msra.mxu0 %v312
    %400 = vmatpush.bf16.msra.mxu0 %v308
    %401 = vmatpush.bf16.msra.mxu0 %v304
    %402 = vmatpush.bf16.msra.mxu0 %v300
    %403 = vmatpush.bf16.msra.mxu0 %v296
    %404 = vmatmul.bf16.gmra.mxu0 0
    %v405 = vpop.f32.mrf.mxu0
    %v406 = vadd.f32 0.0, %v405
    %v407 = vpop.f32.mrf.mxu0
    %408 = vdwg.mxu0
    %v409 = vadd.f32 %v193, %v367
    %v410 = vadd.f32 %v194, %v380
    %v411 = vadd.f32 %v195, %v393
    %v412 = vadd.f32 %v196, %v406
    %v413 = vxor.u32 %v409, 2147483648
    %v414 = vxor.u32 %v410, 2147483648
    %v415 = vxor.u32 %v411, 2147483648
    %v416 = vmul.f32 %v413, 1.442695
    %v417 = vpow.pop %v416
    %v418 = vmul.f32 %v414, 1.442695
    %v419 = vpow.pop %v418
    %v420 = vmul.f32 %v415, 1.442695
    %v421 = vpow.pop %v420
    %v422 = vadd.f32 %v417, 1.0
    %v423 = vadd.f32 %v419, 1.0
    %v424 = vadd.f32 %v421, 1.0
    %v425 = vrcp.pop %v422
    %v426 = vmul.f32 %v422, %v425
    %v427 = vsub.f32 1.0, %v426
    %v428 = vmul.f32 %v425, %v427
    %v429 = vadd.f32 %v425, %v428
    %vm430 = vweird.f32 %v422
    %vm431 = vweird.f32 %v425
    %vm432 = vmor %vm430, %vm431
    %v433 = vsel %vm432, %v425, %v429
    %v434 = vand.u32 2147483647, %v422
    %vm435 = vcmp.eq.f32.partialorder %v434, 8.507059e+37
    %v436 = vand.u32 %v422, 2147483648
    %v437 = vor.u32 1.1754944e-38, %v436
    %v438 = vsel %vm435, %v437, %v433
    %v439 = vmul.f32 1.0, %v438
    %v440 = vrcp.pop %v423
    %v441 = vmul.f32 %v423, %v440
    %v442 = vsub.f32 1.0, %v441
    %v443 = vmul.f32 %v440, %v442
    %v444 = vadd.f32 %v440, %v443
    %vm445 = vweird.f32 %v423
    %vm446 = vweird.f32 %v440
    %vm447 = vmor %vm445, %vm446
    %v448 = vsel %vm447, %v440, %v444
    %v449 = vand.u32 2147483647, %v423
    %vm450 = vcmp.eq.f32.partialorder %v449, 8.507059e+37
    %v451 = vand.u32 %v423, 2147483648
    %v452 = vor.u32 1.1754944e-38, %v451
    %v453 = vsel %vm450, %v452, %v448
    %v454 = vmul.f32 1.0, %v453
    %v455 = vrcp.pop %v424
    %v456 = vmul.f32 %v424, %v455
    %v457 = vsub.f32 1.0, %v456
    %v458 = vmul.f32 %v455, %v457
    %v459 = vadd.f32 %v455, %v458
    %vm460 = vweird.f32 %v424
    %vm461 = vweird.f32 %v455
    %vm462 = vmor %vm460, %vm461
    %v463 = vsel %vm462, %v455, %v459
    %v464 = vand.u32 2147483647, %v424
    %vm465 = vcmp.eq.f32.partialorder %v464, 8.507059e+37
    %v466 = vand.u32 %v424, 2147483648
    %v467 = vor.u32 1.1754944e-38, %v466
    %v468 = vsel %vm465, %v467, %v463
    %v469 = vmul.f32 1.0, %v468
    %v470 = vtanh.pop %v412
    %v471 = vmul.f32 %v454, 0.0
    %v472 = vmul.f32 %v439, %v470
    %v473 = vadd.f32 %v471, %v472
    %v474 = vtanh.pop %v473
    %v475 = vmul.f32 %v469, %v474
    %476 = vst [vmem:[#allocation8] sm:$0x3] %v475
    %v477 = vld [vmem:[#allocation2] sm:$0xc]
    %v478 = vld [vmem:[#allocation2 + $0x8] sm:$0xc]
    %v479 = vld [vmem:[#allocation2 + $0x10] sm:$0xc]
    %v480 = vld [vmem:[#allocation2 + $0x18] sm:$0xc]
    %v481 = vpack.c.bf16 %v475, %v475
    %482 = vmatpush.bf16.msra.mxu0 %v321
    %483 = vmatpush.bf16.msra.mxu0 %v317
    %484 = vmatpush.bf16.msra.mxu0 %v313
    %485 = vmatpush.bf16.msra.mxu0 %v309
    %486 = vmatpush.bf16.msra.mxu0 %v305
    %487 = vmatpush.bf16.msra.mxu0 %v301
    %488 = vmatpush.bf16.msra.mxu0 %v297
    %489 = vmatpush.bf16.msra.mxu0 %v293
    %490 = vmatmul.bf16.gmra.mxu0 %v481
    %v491 = vpop.f32.mrf.mxu0
    %v492 = vadd.f32 0.0, %v491
    %v493 = vpop.f32.mrf.mxu0
    %494 = vdwg.mxu0
    %495 = vmatpush.bf16.msra.mxu0 %v322
    %496 = vmatpush.bf16.msra.mxu0 %v318
    %497 = vmatpush.bf16.msra.mxu0 %v314
    %498 = vmatpush.bf16.msra.mxu0 %v310
    %499 = vmatpush.bf16.msra.mxu0 %v306
    %500 = vmatpush.bf16.msra.mxu0 %v302
    %501 = vmatpush.bf16.msra.mxu0 %v298
    %502 = vmatpush.bf16.msra.mxu0 %v294
    %503 = vmatmul.bf16.gmra.mxu0 %v481
    %v504 = vpop.f32.mrf.mxu0
    %v505 = vadd.f32 0.0, %v504
    %v506 = vpop.f32.mrf.mxu0
    %507 = vdwg.mxu0
    %508 = vmatpush.bf16.msra.mxu0 %v323
    %509 = vmatpush.bf16.msra.mxu0 %v319
    %510 = vmatpush.bf16.msra.mxu0 %v315
    %511 = vmatpush.bf16.msra.mxu0 %v311
    %512 = vmatpush.bf16.msra.mxu0 %v307
    %513 = vmatpush.bf16.msra.mxu0 %v303
    %514 = vmatpush.bf16.msra.mxu0 %v299
    %515 = vmatpush.bf16.msra.mxu0 %v295
    %516 = vmatmul.bf16.gmra.mxu0 %v481
    %v517 = vpop.f32.mrf.mxu0
    %v518 = vadd.f32 0.0, %v517
    %v519 = vpop.f32.mrf.mxu0
    %520 = vdwg.mxu0
    %521 = vmatpush.bf16.msra.mxu0 %v324
    %522 = vmatpush.bf16.msra.mxu0 %v320
    %523 = vmatpush.bf16.msra.mxu0 %v316
    %524 = vmatpush.bf16.msra.mxu0 %v312
    %525 = vmatpush.bf16.msra.mxu0 %v308
    %526 = vmatpush.bf16.msra.mxu0 %v304
    %527 = vmatpush.bf16.msra.mxu0 %v300
    %528 = vmatpush.bf16.msra.mxu0 %v296
    %529 = vmatmul.bf16.gmra.mxu0 %v481
    %v530 = vpop.f32.mrf.mxu0
    %v531 = vadd.f32 0.0, %v530
    %v532 = vpop.f32.mrf.mxu0
    %533 = vdwg.mxu0
    %v538 = vrot.slane %v492, 6
    %v539 = vrot.slane %v505, 6
    %v540 = vrot.slane %v518, 6
    %v541 = vrot.slane %v531, 6
    %v546 = vadd.f32 %v477, %v538
    %v547 = vadd.f32 %v478, %v539
    %v548 = vadd.f32 %v479, %v540
    %v549 = vadd.f32 %v480, %v541
    %v550 = vxor.u32 %v546, 2147483648
    %v551 = vxor.u32 %v547, 2147483648
    %v552 = vxor.u32 %v548, 2147483648
    %v553 = vmul.f32 %v550, 1.442695
    %v554 = vpow.pop %v553
    %v555 = vmul.f32 %v551, 1.442695
    %v556 = vpow.pop %v555
    %v557 = vmul.f32 %v552, 1.442695
    %v558 = vpow.pop %v557
    %v559 = vadd.f32 %v554, 1.0
    %v560 = vadd.f32 %v556, 1.0
    %v561 = vadd.f32 %v558, 1.0
    %v562 = vrcp.pop %v559
    %v563 = vmul.f32 %v559, %v562
    %v564 = vsub.f32 1.0, %v563
    %v565 = vmul.f32 %v562, %v564
    %v566 = vadd.f32 %v562, %v565
    %vm567 = vweird.f32 %v559
    %vm568 = vweird.f32 %v562
    %vm569 = vmor %vm567, %vm568
    %v570 = vsel %vm569, %v562, %v566
    %v571 = vand.u32 2147483647, %v559
    %vm572 = vcmp.eq.f32.partialorder %v571, 8.507059e+37
    %v573 = vand.u32 %v559, 2147483648
    %v574 = vor.u32 1.1754944e-38, %v573
    %v575 = vsel %vm572, %v574, %v570
    %v576 = vmul.f32 1.0, %v575
    %v577 = vrcp.pop %v560
    %v578 = vmul.f32 %v560, %v577
    %v579 = vsub.f32 1.0, %v578
    %v580 = vmul.f32 %v577, %v579
    %v581 = vadd.f32 %v577, %v580
    %vm582 = vweird.f32 %v560
    %vm583 = vweird.f32 %v577
    %vm584 = vmor %vm582, %vm583
    %v585 = vsel %vm584, %v577, %v581
    %v586 = vand.u32 2147483647, %v560
    %vm587 = vcmp.eq.f32.partialorder %v586, 8.507059e+37
    %v588 = vand.u32 %v560, 2147483648
    %v589 = vor.u32 1.1754944e-38, %v588
    %v590 = vsel %vm587, %v589, %v585
    %v591 = vmul.f32 1.0, %v590
    %v592 = vrcp.pop %v561
    %v593 = vmul.f32 %v561, %v592
    %v594 = vsub.f32 1.0, %v593
    %v595 = vmul.f32 %v592, %v594
    %v596 = vadd.f32 %v592, %v595
    %vm597 = vweird.f32 %v561
    %vm598 = vweird.f32 %v592
    %vm599 = vmor %vm597, %vm598
    %v600 = vsel %vm599, %v592, %v596
    %v601 = vand.u32 2147483647, %v561
    %vm602 = vcmp.eq.f32.partialorder %v601, 8.507059e+37
    %v603 = vand.u32 %v561, 2147483648
    %v604 = vor.u32 1.1754944e-38, %v603
    %v605 = vsel %vm602, %v604, %v600
    %v606 = vmul.f32 1.0, %v605
    %v607 = vtanh.pop %v549
    %v609 = vrot.slane %v473, 6
    %v611 = vmul.f32 %v591, %v609
    %v612 = vmul.f32 %v576, %v607
    %v613 = vadd.f32 %v611, %v612
    %v614 = vtanh.pop %v613
    %v615 = vmul.f32 %v606, %v614
    %617 = vst.sshfl [vmem:[#allocation1] sm:$0xff pattern:$0x73625140] %v615
    %s618 = scalar_lea.vmem [#allocation1], 1
    %v619 = vld [vmem:[%s618] ss:$4 sm:$0xff]
    %621 = vst [vmem:[#allocation8 + $0x2] sm:$0x3] %v619
    %v622 = vld [vmem:[#allocation2] sm:$0x30]
    %v623 = vld [vmem:[#allocation2 + $0x8] sm:$0x30]
    %v624 = vld [vmem:[#allocation2 + $0x10] sm:$0x30]
    %v625 = vld [vmem:[#allocation2 + $0x18] sm:$0x30]
    %v626 = vpack.c.bf16 %v615, %v615
    %v628 = vrot.slane %v626, 1
    %630 = vmatpush.bf16.msra.mxu0 %v321
    %631 = vmatpush.bf16.msra.mxu0 %v317
    %632 = vmatpush.bf16.msra.mxu0 %v313
    %633 = vmatpush.bf16.msra.mxu0 %v309
    %634 = vmatpush.bf16.msra.mxu0 %v305
    %635 = vmatpush.bf16.msra.mxu0 %v301
    %636 = vmatpush.bf16.msra.mxu0 %v297
    %637 = vmatpush.bf16.msra.mxu0 %v293
    %638 = vmatmul.bf16.gmra.mxu0 %v628
    %v639 = vpop.f32.mrf.mxu0
    %v640 = vadd.f32 0.0, %v639
    %v641 = vpop.f32.mrf.mxu0
    %642 = vdwg.mxu0
    %643 = vmatpush.bf16.msra.mxu0 %v322
    %644 = vmatpush.bf16.msra.mxu0 %v318
    %645 = vmatpush.bf16.msra.mxu0 %v314
    %646 = vmatpush.bf16.msra.mxu0 %v310
    %647 = vmatpush.bf16.msra.mxu0 %v306
    %648 = vmatpush.bf16.msra.mxu0 %v302
    %649 = vmatpush.bf16.msra.mxu0 %v298
    %650 = vmatpush.bf16.msra.mxu0 %v294
    %651 = vmatmul.bf16.gmra.mxu0 %v628
    %v652 = vpop.f32.mrf.mxu0
    %v653 = vadd.f32 0.0, %v652
    %v654 = vpop.f32.mrf.mxu0
    %655 = vdwg.mxu0
    %656 = vmatpush.bf16.msra.mxu0 %v323
    %657 = vmatpush.bf16.msra.mxu0 %v319
    %658 = vmatpush.bf16.msra.mxu0 %v315
    %659 = vmatpush.bf16.msra.mxu0 %v311
    %660 = vmatpush.bf16.msra.mxu0 %v307
    %661 = vmatpush.bf16.msra.mxu0 %v303
    %662 = vmatpush.bf16.msra.mxu0 %v299
    %663 = vmatpush.bf16.msra.mxu0 %v295
    %664 = vmatmul.bf16.gmra.mxu0 %v628
    %v665 = vpop.f32.mrf.mxu0
    %v666 = vadd.f32 0.0, %v665
    %v667 = vpop.f32.mrf.mxu0
    %668 = vdwg.mxu0
    %669 = vmatpush.bf16.msra.mxu0 %v324
    %670 = vmatpush.bf16.msra.mxu0 %v320
    %671 = vmatpush.bf16.msra.mxu0 %v316
    %672 = vmatpush.bf16.msra.mxu0 %v312
    %673 = vmatpush.bf16.msra.mxu0 %v308
    %674 = vmatpush.bf16.msra.mxu0 %v304
    %675 = vmatpush.bf16.msra.mxu0 %v300
    %676 = vmatpush.bf16.msra.mxu0 %v296
    %677 = vmatmul.bf16.gmra.mxu0 %v628
    %v678 = vpop.f32.mrf.mxu0
    %v679 = vadd.f32 0.0, %v678
    %v680 = vpop.f32.mrf.mxu0
    %681 = vdwg.mxu0
    %v686 = vrot.slane %v640, 4
    %v687 = vrot.slane %v653, 4
    %v688 = vrot.slane %v666, 4
    %v689 = vrot.slane %v679, 4
    %v694 = vadd.f32 %v622, %v686
    %v695 = vadd.f32 %v623, %v687
    %v696 = vadd.f32 %v624, %v688
    %v697 = vadd.f32 %v625, %v689
    %v698 = vxor.u32 %v694, 2147483648
    %v699 = vxor.u32 %v695, 2147483648
    %v700 = vxor.u32 %v696, 2147483648
    %v701 = vmul.f32 %v698, 1.442695
    %v702 = vpow.pop %v701
    %v703 = vmul.f32 %v699, 1.442695
    %v704 = vpow.pop %v703
    %v705 = vmul.f32 %v700, 1.442695
    %v706 = vpow.pop %v705
    %v707 = vadd.f32 %v702, 1.0
    %v708 = vadd.f32 %v704, 1.0
    %v709 = vadd.f32 %v706, 1.0
    %v710 = vrcp.pop %v707
    %v711 = vmul.f32 %v707, %v710
    %v712 = vsub.f32 1.0, %v711
    %v713 = vmul.f32 %v710, %v712
    %v714 = vadd.f32 %v710, %v713
    %vm715 = vweird.f32 %v707
    %vm716 = vweird.f32 %v710
    %vm717 = vmor %vm715, %vm716
    %v718 = vsel %vm717, %v710, %v714
    %v719 = vand.u32 2147483647, %v707
    %vm720 = vcmp.eq.f32.partialorder %v719, 8.507059e+37
    %v721 = vand.u32 %v707, 2147483648
    %v722 = vor.u32 1.1754944e-38, %v721
    %v723 = vsel %vm720, %v722, %v718
    %v724 = vmul.f32 1.0, %v723
    %v725 = vrcp.pop %v708
    %v726 = vmul.f32 %v708, %v725
    %v727 = vsub.f32 1.0, %v726
    %v728 = vmul.f32 %v725, %v727
    %v729 = vadd.f32 %v725, %v728
    %vm730 = vweird.f32 %v708
    %vm731 = vweird.f32 %v725
    %vm732 = vmor %vm730, %vm731
    %v733 = vsel %vm732, %v725, %v729
    %v734 = vand.u32 2147483647, %v708
    %vm735 = vcmp.eq.f32.partialorder %v734, 8.507059e+37
    %v736 = vand.u32 %v708, 2147483648
    %v737 = vor.u32 1.1754944e-38, %v736
    %v738 = vsel %vm735, %v737, %v733
    %v739 = vmul.f32 1.0, %v738
    %v740 = vrcp.pop %v709
    %v741 = vmul.f32 %v709, %v740
    %v742 = vsub.f32 1.0, %v741
    %v743 = vmul.f32 %v740, %v742
    %v744 = vadd.f32 %v740, %v743
    %vm745 = vweird.f32 %v709
    %vm746 = vweird.f32 %v740
    %vm747 = vmor %vm745, %vm746
    %v748 = vsel %vm747, %v740, %v744
    %v749 = vand.u32 2147483647, %v709
    %vm750 = vcmp.eq.f32.partialorder %v749, 8.507059e+37
    %v751 = vand.u32 %v709, 2147483648
    %v752 = vor.u32 1.1754944e-38, %v751
    %v753 = vsel %vm750, %v752, %v748
    %v754 = vmul.f32 1.0, %v753
    %v755 = vtanh.pop %v697
    %v757 = vrot.slane %v613, 6
    %v759 = vmul.f32 %v739, %v757
    %v760 = vmul.f32 %v724, %v755
    %v761 = vadd.f32 %v759, %v760
    %v762 = vtanh.pop %v761
    %v763 = vmul.f32 %v754, %v762
    %765 = vst.sshfl [vmem:[#allocation1] sm:$0xff pattern:$0x73625140] %v763
    %s766 = scalar_lea.vmem [#allocation1], 2
    %v767 = vld [vmem:[%s766] ss:$4 sm:$0xff]
    %769 = vst [vmem:[#allocation8 + $0x4] sm:$0x3] %v767
    %v770 = vld [vmem:[#allocation2] sm:$0xc0]
    %v771 = vld [vmem:[#allocation2 + $0x8] sm:$0xc0]
    %v772 = vld [vmem:[#allocation2 + $0x10] sm:$0xc0]
    %v773 = vld [vmem:[#allocation2 + $0x18] sm:$0xc0]
    %v774 = vpack.c.bf16 %v763, %v763
    %v776 = vrot.slane %v774, 2
    %778 = vmatpush.bf16.msra.mxu0 %v321
    %779 = vmatpush.bf16.msra.mxu0 %v317
    %780 = vmatpush.bf16.msra.mxu0 %v313
    %781 = vmatpush.bf16.msra.mxu0 %v309
    %782 = vmatpush.bf16.msra.mxu0 %v305
    %783 = vmatpush.bf16.msra.mxu0 %v301
    %784 = vmatpush.bf16.msra.mxu0 %v297
    %785 = vmatpush.bf16.msra.mxu0 %v293
    %786 = vmatmul.bf16.gmra.mxu0 %v776
    %v787 = vpop.f32.mrf.mxu0
    %v788 = vadd.f32 0.0, %v787
    %v789 = vpop.f32.mrf.mxu0
    %790 = vdwg.mxu0
    %791 = vmatpush.bf16.msra.mxu0 %v322
    %792 = vmatpush.bf16.msra.mxu0 %v318
    %793 = vmatpush.bf16.msra.mxu0 %v314
    %794 = vmatpush.bf16.msra.mxu0 %v310
    %795 = vmatpush.bf16.msra.mxu0 %v306
    %796 = vmatpush.bf16.msra.mxu0 %v302
    %797 = vmatpush.bf16.msra.mxu0 %v298
    %798 = vmatpush.bf16.msra.mxu0 %v294
    %799 = vmatmul.bf16.gmra.mxu0 %v776
    %v800 = vpop.f32.mrf.mxu0
    %v801 = vadd.f32 0.0, %v800
    %v802 = vpop.f32.mrf.mxu0
    %803 = vdwg.mxu0
    %804 = vmatpush.bf16.msra.mxu0 %v323
    %805 = vmatpush.bf16.msra.mxu0 %v319
    %806 = vmatpush.bf16.msra.mxu0 %v315
    %807 = vmatpush.bf16.msra.mxu0 %v311
    %808 = vmatpush.bf16.msra.mxu0 %v307
    %809 = vmatpush.bf16.msra.mxu0 %v303
    %810 = vmatpush.bf16.msra.mxu0 %v299
    %811 = vmatpush.bf16.msra.mxu0 %v295
    %812 = vmatmul.bf16.gmra.mxu0 %v776
    %v813 = vpop.f32.mrf.mxu0
    %v814 = vadd.f32 0.0, %v813
    %v815 = vpop.f32.mrf.mxu0
    %816 = vdwg.mxu0
    %817 = vmatpush.bf16.msra.mxu0 %v324
    %818 = vmatpush.bf16.msra.mxu0 %v320
    %819 = vmatpush.bf16.msra.mxu0 %v316
    %820 = vmatpush.bf16.msra.mxu0 %v312
    %821 = vmatpush.bf16.msra.mxu0 %v308
    %822 = vmatpush.bf16.msra.mxu0 %v304
    %823 = vmatpush.bf16.msra.mxu0 %v300
    %824 = vmatpush.bf16.msra.mxu0 %v296
    %825 = vmatmul.bf16.gmra.mxu0 %v776
    %v826 = vpop.f32.mrf.mxu0
    %v827 = vadd.f32 0.0, %v826
    %v828 = vpop.f32.mrf.mxu0
    %829 = vdwg.mxu0
    %v834 = vrot.slane %v788, 2
    %v835 = vrot.slane %v801, 2
    %v836 = vrot.slane %v814, 2
    %v837 = vrot.slane %v827, 2
    %v842 = vadd.f32 %v770, %v834
    %v843 = vadd.f32 %v771, %v835
    %v844 = vadd.f32 %v772, %v836
    %v845 = vadd.f32 %v773, %v837
    %v846 = vxor.u32 %v842, 2147483648
    %v847 = vxor.u32 %v843, 2147483648
    %v848 = vxor.u32 %v844, 2147483648
    %v849 = vmul.f32 %v846, 1.442695
    %v850 = vpow.pop %v849
    %v851 = vmul.f32 %v847, 1.442695
    %v852 = vpow.pop %v851
    %v853 = vmul.f32 %v848, 1.442695
    %v854 = vpow.pop %v853
    %v855 = vadd.f32 %v850, 1.0
    %v856 = vadd.f32 %v852, 1.0
    %v857 = vadd.f32 %v854, 1.0
    %v858 = vrcp.pop %v855
    %v859 = vmul.f32 %v855, %v858
    %v860 = vsub.f32 1.0, %v859
    %v861 = vmul.f32 %v858, %v860
    %v862 = vadd.f32 %v858, %v861
    %vm863 = vweird.f32 %v855
    %vm864 = vweird.f32 %v858
    %vm865 = vmor %vm863, %vm864
    %v866 = vsel %vm865, %v858, %v862
    %v867 = vand.u32 2147483647, %v855
    %vm868 = vcmp.eq.f32.partialorder %v867, 8.507059e+37
    %v869 = vand.u32 %v855, 2147483648
    %v870 = vor.u32 1.1754944e-38, %v869
    %v871 = vsel %vm868, %v870, %v866
    %v872 = vmul.f32 1.0, %v871
    %v873 = vrcp.pop %v856
    %v874 = vmul.f32 %v856, %v873
    %v875 = vsub.f32 1.0, %v874
    %v876 = vmul.f32 %v873, %v875
    %v877 = vadd.f32 %v873, %v876
    %vm878 = vweird.f32 %v856
    %vm879 = vweird.f32 %v873
    %vm880 = vmor %vm878, %vm879
    %v881 = vsel %vm880, %v873, %v877
    %v882 = vand.u32 2147483647, %v856
    %vm883 = vcmp.eq.f32.partialorder %v882, 8.507059e+37
    %v884 = vand.u32 %v856, 2147483648
    %v885 = vor.u32 1.1754944e-38, %v884
    %v886 = vsel %vm883, %v885, %v881
    %v887 = vmul.f32 1.0, %v886
    %v888 = vrcp.pop %v857
    %v889 = vmul.f32 %v857, %v888
    %v890 = vsub.f32 1.0, %v889
    %v891 = vmul.f32 %v888, %v890
    %v892 = vadd.f32 %v888, %v891
    %vm893 = vweird.f32 %v857
    %vm894 = vweird.f32 %v888
    %vm895 = vmor %vm893, %vm894
    %v896 = vsel %vm895, %v888, %v892
    %v897 = vand.u32 2147483647, %v857
    %vm898 = vcmp.eq.f32.partialorder %v897, 8.507059e+37
    %v899 = vand.u32 %v857, 2147483648
    %v900 = vor.u32 1.1754944e-38, %v899
    %v901 = vsel %vm898, %v900, %v896
    %v902 = vmul.f32 1.0, %v901
    %v903 = vtanh.pop %v845
    %v905 = vrot.slane %v761, 6
    %v907 = vmul.f32 %v887, %v905
    %v908 = vmul.f32 %v872, %v903
    %v909 = vadd.f32 %v907, %v908
    %v910 = vtanh.pop %v909
    %v911 = vmul.f32 %v902, %v910
    %913 = vst.sshfl [vmem:[#allocation1] sm:$0xff pattern:$0x73625140] %v911
    %s914 = scalar_lea.vmem [#allocation1], 3
    %v915 = vld [vmem:[%s914] ss:$4 sm:$0xff]
    %917 = vst [vmem:[#allocation8 + $0x6] sm:$0x3] %v915
    %v918 = vld [vmem:[#allocation2 + $0x20] sm:$0x3]
    %v919 = vld [vmem:[#allocation2 + $0x28] sm:$0x3]
    %v920 = vld [vmem:[#allocation2 + $0x30] sm:$0x3]
    %v921 = vld [vmem:[#allocation2 + $0x38] sm:$0x3]
    %v922 = vpack.c.bf16 %v911, %v911
    %v924 = vrot.slane %v922, 3
    %926 = vmatpush.bf16.msra.mxu0 %v321
    %927 = vmatpush.bf16.msra.mxu0 %v317
    %928 = vmatpush.bf16.msra.mxu0 %v313
    %929 = vmatpush.bf16.msra.mxu0 %v309
    %930 = vmatpush.bf16.msra.mxu0 %v305
    %931 = vmatpush.bf16.msra.mxu0 %v301
    %932 = vmatpush.bf16.msra.mxu0 %v297
    %933 = vmatpush.bf16.msra.mxu0 %v293
    %934 = vmatmul.bf16.gmra.mxu0 %v924
    %v935 = vpop.f32.mrf.mxu0
    %v936 = vadd.f32 0.0, %v935
    %v937 = vpop.f32.mrf.mxu0
    %938 = vdwg.mxu0
    %939 = vmatpush.bf16.msra.mxu0 %v322
    %940 = vmatpush.bf16.msra.mxu0 %v318
    %941 = vmatpush.bf16.msra.mxu0 %v314
    %942 = vmatpush.bf16.msra.mxu0 %v310
    %943 = vmatpush.bf16.msra.mxu0 %v306
    %944 = vmatpush.bf16.msra.mxu0 %v302
    %945 = vmatpush.bf16.msra.mxu0 %v298
    %946 = vmatpush.bf16.msra.mxu0 %v294
    %947 = vmatmul.bf16.gmra.mxu0 %v924
    %v948 = vpop.f32.mrf.mxu0
    %v949 = vadd.f32 0.0, %v948
    %v950 = vpop.f32.mrf.mxu0
    %951 = vdwg.mxu0
    %952 = vmatpush.bf16.msra.mxu0 %v323
    %953 = vmatpush.bf16.msra.mxu0 %v319
    %954 = vmatpush.bf16.msra.mxu0 %v315
    %955 = vmatpush.bf16.msra.mxu0 %v311
    %956 = vmatpush.bf16.msra.mxu0 %v307
    %957 = vmatpush.bf16.msra.mxu0 %v303
    %958 = vmatpush.bf16.msra.mxu0 %v299
    %959 = vmatpush.bf16.msra.mxu0 %v295
    %960 = vmatmul.bf16.gmra.mxu0 %v924
    %v961 = vpop.f32.mrf.mxu0
    %v962 = vadd.f32 0.0, %v961
    %v963 = vpop.f32.mrf.mxu0
    %964 = vdwg.mxu0
    %965 = vmatpush.bf16.msra.mxu0 %v324
    %966 = vmatpush.bf16.msra.mxu0 %v320
    %967 = vmatpush.bf16.msra.mxu0 %v316
    %968 = vmatpush.bf16.msra.mxu0 %v312
    %969 = vmatpush.bf16.msra.mxu0 %v308
    %970 = vmatpush.bf16.msra.mxu0 %v304
    %971 = vmatpush.bf16.msra.mxu0 %v300
    %972 = vmatpush.bf16.msra.mxu0 %v296
    %973 = vmatmul.bf16.gmra.mxu0 %v924
    %v974 = vpop.f32.mrf.mxu0
    %v975 = vadd.f32 0.0, %v974
    %v976 = vpop.f32.mrf.mxu0
    %977 = vdwg.mxu0
    %v978 = vadd.f32 %v918, %v936
    %v979 = vadd.f32 %v919, %v949
    %v980 = vadd.f32 %v920, %v962
    %v981 = vadd.f32 %v921, %v975
    %v982 = vxor.u32 %v978, 2147483648
    %v983 = vxor.u32 %v979, 2147483648
    %v984 = vxor.u32 %v980, 2147483648
    %v985 = vmul.f32 %v982, 1.442695
    %v986 = vpow.pop %v985
    %v987 = vmul.f32 %v983, 1.442695
    %v988 = vpow.pop %v987
    %v989 = vmul.f32 %v984, 1.442695
    %v990 = vpow.pop %v989
    %v991 = vadd.f32 %v986, 1.0
    %v992 = vadd.f32 %v988, 1.0
    %v993 = vadd.f32 %v990, 1.0
    %v994 = vrcp.pop %v991
    %v995 = vmul.f32 %v991, %v994
    %v996 = vsub.f32 1.0, %v995
    %v997 = vmul.f32 %v994, %v996
    %v998 = vadd.f32 %v994, %v997
    %vm999 = vweird.f32 %v991
    %vm1000 = vweird.f32 %v994
    %vm1001 = vmor %vm999, %vm1000
    %v1002 = vsel %vm1001, %v994, %v998
    %v1003 = vand.u32 2147483647, %v991
    %vm1004 = vcmp.eq.f32.partialorder %v1003, 8.507059e+37
    %v1005 = vand.u32 %v991, 2147483648
    %v1006 = vor.u32 1.1754944e-38, %v1005
    %v1007 = vsel %vm1004, %v1006, %v1002
    %v1008 = vmul.f32 1.0, %v1007
    %v1009 = vrcp.pop %v992
    %v1010 = vmul.f32 %v992, %v1009
    %v1011 = vsub.f32 1.0, %v1010
    %v1012 = vmul.f32 %v1009, %v1011
    %v1013 = vadd.f32 %v1009, %v1012
    %vm1014 = vweird.f32 %v992
    %vm1015 = vweird.f32 %v1009
    %vm1016 = vmor %vm1014, %vm1015
    %v1017 = vsel %vm1016, %v1009, %v1013
    %v1018 = vand.u32 2147483647, %v992
    %vm1019 = vcmp.eq.f32.partialorder %v1018, 8.507059e+37
    %v1020 = vand.u32 %v992, 2147483648
    %v1021 = vor.u32 1.1754944e-38, %v1020
    %v1022 = vsel %vm1019, %v1021, %v1017
    %v1023 = vmul.f32 1.0, %v1022
    %v1024 = vrcp.pop %v993
    %v1025 = vmul.f32 %v993, %v1024
    %v1026 = vsub.f32 1.0, %v1025
    %v1027 = vmul.f32 %v1024, %v1026
    %v1028 = vadd.f32 %v1024, %v1027
    %vm1029 = vweird.f32 %v993
    %vm1030 = vweird.f32 %v1024
    %vm1031 = vmor %vm1029, %vm1030
    %v1032 = vsel %vm1031, %v1024, %v1028
    %v1033 = vand.u32 2147483647, %v993
    %vm1034 = vcmp.eq.f32.partialorder %v1033, 8.507059e+37
    %v1035 = vand.u32 %v993, 2147483648
    %v1036 = vor.u32 1.1754944e-38, %v1035
    %v1037 = vsel %vm1034, %v1036, %v1032
    %v1038 = vmul.f32 1.0, %v1037
    %v1039 = vtanh.pop %v981
    %v1041 = vrot.slane %v909, 6
    %v1043 = vmul.f32 %v1023, %v1041
    %v1044 = vmul.f32 %v1008, %v1039
    %v1045 = vadd.f32 %v1043, %v1044
    %v1046 = vtanh.pop %v1045
    %v1047 = vmul.f32 %v1038, %v1046
    %1048 = vst [vmem:[#allocation8 + $0x8] sm:$0x3] %v1047
    %v1049 = vld [vmem:[#allocation2 + $0x20] sm:$0xc]
    %v1050 = vld [vmem:[#allocation2 + $0x28] sm:$0xc]
    %v1051 = vld [vmem:[#allocation2 + $0x30] sm:$0xc]
    %v1052 = vld [vmem:[#allocation2 + $0x38] sm:$0xc]
    %v1053 = vpack.c.bf16 %v1047, %v1047
    %1054 = vmatpush.bf16.msra.mxu0 %v321
    %1055 = vmatpush.bf16.msra.mxu0 %v317
    %1056 = vmatpush.bf16.msra.mxu0 %v313
    %1057 = vmatpush.bf16.msra.mxu0 %v309
    %1058 = vmatpush.bf16.msra.mxu0 %v305
    %1059 = vmatpush.bf16.msra.mxu0 %v301
    %1060 = vmatpush.bf16.msra.mxu0 %v297
    %1061 = vmatpush.bf16.msra.mxu0 %v293
    %1062 = vmatmul.bf16.gmra.mxu0 %v1053
    %v1063 = vpop.f32.mrf.mxu0
    %v1064 = vadd.f32 0.0, %v1063
    %v1065 = vpop.f32.mrf.mxu0
    %1066 = vdwg.mxu0
    %1067 = vmatpush.bf16.msra.mxu0 %v322
    %1068 = vmatpush.bf16.msra.mxu0 %v318
    %1069 = vmatpush.bf16.msra.mxu0 %v314
    %1070 = vmatpush.bf16.msra.mxu0 %v310
    %1071 = vmatpush.bf16.msra.mxu0 %v306
    %1072 = vmatpush.bf16.msra.mxu0 %v302
    %1073 = vmatpush.bf16.msra.mxu0 %v298
    %1074 = vmatpush.bf16.msra.mxu0 %v294
    %1075 = vmatmul.bf16.gmra.mxu0 %v1053
    %v1076 = vpop.f32.mrf.mxu0
    %v1077 = vadd.f32 0.0, %v1076
    %v1078 = vpop.f32.mrf.mxu0
    %1079 = vdwg.mxu0
    %1080 = vmatpush.bf16.msra.mxu0 %v323
    %1081 = vmatpush.bf16.msra.mxu0 %v319
    %1082 = vmatpush.bf16.msra.mxu0 %v315
    %1083 = vmatpush.bf16.msra.mxu0 %v311
    %1084 = vmatpush.bf16.msra.mxu0 %v307
    %1085 = vmatpush.bf16.msra.mxu0 %v303
    %1086 = vmatpush.bf16.msra.mxu0 %v299
    %1087 = vmatpush.bf16.msra.mxu0 %v295
    %1088 = vmatmul.bf16.gmra.mxu0 %v1053
    %v1089 = vpop.f32.mrf.mxu0
    %v1090 = vadd.f32 0.0, %v1089
    %v1091 = vpop.f32.mrf.mxu0
    %1092 = vdwg.mxu0
    %1093 = vmatpush.bf16.msra.mxu0 %v324
    %1094 = vmatpush.bf16.msra.mxu0 %v320
    %1095 = vmatpush.bf16.msra.mxu0 %v316
    %1096 = vmatpush.bf16.msra.mxu0 %v312
    %1097 = vmatpush.bf16.msra.mxu0 %v308
    %1098 = vmatpush.bf16.msra.mxu0 %v304
    %1099 = vmatpush.bf16.msra.mxu0 %v300
    %1100 = vmatpush.bf16.msra.mxu0 %v296
    %1101 = vmatmul.bf16.gmra.mxu0 %v1053
    %v1102 = vpop.f32.mrf.mxu0
    %v1103 = vadd.f32 0.0, %v1102
    %v1104 = vpop.f32.mrf.mxu0
    %1105 = vdwg.mxu0
    %v1110 = vrot.slane %v1064, 6
    %v1111 = vrot.slane %v1077, 6
    %v1112 = vrot.slane %v1090, 6
    %v1113 = vrot.slane %v1103, 6
    %v1118 = vadd.f32 %v1049, %v1110
    %v1119 = vadd.f32 %v1050, %v1111
    %v1120 = vadd.f32 %v1051, %v1112
    %v1121 = vadd.f32 %v1052, %v1113
    %v1122 = vxor.u32 %v1118, 2147483648
    %v1123 = vxor.u32 %v1119, 2147483648
    %v1124 = vxor.u32 %v1120, 2147483648
    %v1125 = vmul.f32 %v1122, 1.442695
    %v1126 = vpow.pop %v1125
    %v1127 = vmul.f32 %v1123, 1.442695
    %v1128 = vpow.pop %v1127
    %v1129 = vmul.f32 %v1124, 1.442695
    %v1130 = vpow.pop %v1129
    %v1131 = vadd.f32 %v1126, 1.0
    %v1132 = vadd.f32 %v1128, 1.0
    %v1133 = vadd.f32 %v1130, 1.0
    %v1134 = vrcp.pop %v1131
    %v1135 = vmul.f32 %v1131, %v1134
    %v1136 = vsub.f32 1.0, %v1135
    %v1137 = vmul.f32 %v1134, %v1136
    %v1138 = vadd.f32 %v1134, %v1137
    %vm1139 = vweird.f32 %v1131
    %vm1140 = vweird.f32 %v1134
    %vm1141 = vmor %vm1139, %vm1140
    %v1142 = vsel %vm1141, %v1134, %v1138
    %v1143 = vand.u32 2147483647, %v1131
    %vm1144 = vcmp.eq.f32.partialorder %v1143, 8.507059e+37
    %v1145 = vand.u32 %v1131, 2147483648
    %v1146 = vor.u32 1.1754944e-38, %v1145
    %v1147 = vsel %vm1144, %v1146, %v1142
    %v1148 = vmul.f32 1.0, %v1147
    %v1149 = vrcp.pop %v1132
    %v1150 = vmul.f32 %v1132, %v1149
    %v1151 = vsub.f32 1.0, %v1150
    %v1152 = vmul.f32 %v1149, %v1151
    %v1153 = vadd.f32 %v1149, %v1152
    %vm1154 = vweird.f32 %v1132
    %vm1155 = vweird.f32 %v1149
    %vm1156 = vmor %vm1154, %vm1155
    %v1157 = vsel %vm1156, %v1149, %v1153
    %v1158 = vand.u32 2147483647, %v1132
    %vm1159 = vcmp.eq.f32.partialorder %v1158, 8.507059e+37
    %v1160 = vand.u32 %v1132, 2147483648
    %v1161 = vor.u32 1.1754944e-38, %v1160
    %v1162 = vsel %vm1159, %v1161, %v1157
    %v1163 = vmul.f32 1.0, %v1162
    %v1164 = vrcp.pop %v1133
    %v1165 = vmul.f32 %v1133, %v1164
    %v1166 = vsub.f32 1.0, %v1165
    %v1167 = vmul.f32 %v1164, %v1166
    %v1168 = vadd.f32 %v1164, %v1167
    %vm1169 = vweird.f32 %v1133
    %vm1170 = vweird.f32 %v1164
    %vm1171 = vmor %vm1169, %vm1170
    %v1172 = vsel %vm1171, %v1164, %v1168
    %v1173 = vand.u32 2147483647, %v1133
    %vm1174 = vcmp.eq.f32.partialorder %v1173, 8.507059e+37
    %v1175 = vand.u32 %v1133, 2147483648
    %v1176 = vor.u32 1.1754944e-38, %v1175
    %v1177 = vsel %vm1174, %v1176, %v1172
    %v1178 = vmul.f32 1.0, %v1177
    %v1179 = vtanh.pop %v1121
    %v1181 = vrot.slane %v1045, 6
    %v1183 = vmul.f32 %v1163, %v1181
    %v1184 = vmul.f32 %v1148, %v1179
    %v1185 = vadd.f32 %v1183, %v1184
    %v1186 = vtanh.pop %v1185
    %v1187 = vmul.f32 %v1178, %v1186
    %1189 = vst.sshfl [vmem:[#allocation1] sm:$0xff pattern:$0x73625140] %v1187
    %s1190 = scalar_lea.vmem [#allocation1], 1
    %v1191 = vld [vmem:[%s1190] ss:$4 sm:$0xff]
    %1193 = vst [vmem:[#allocation8 + $0xa] sm:$0x3] %v1191
    %v1194 = vld [vmem:[#allocation2 + $0x20] sm:$0x30]
    %v1195 = vld [vmem:[#allocation2 + $0x28] sm:$0x30]
    %v1196 = vld [vmem:[#allocation2 + $0x30] sm:$0x30]
    %v1197 = vld [vmem:[#allocation2 + $0x38] sm:$0x30]
    %v1198 = vpack.c.bf16 %v1187, %v1187
    %v1200 = vrot.slane %v1198, 1
    %1202 = vmatpush.bf16.msra.mxu0 %v321
    %1203 = vmatpush.bf16.msra.mxu0 %v317
    %1204 = vmatpush.bf16.msra.mxu0 %v313
    %1205 = vmatpush.bf16.msra.mxu0 %v309
    %1206 = vmatpush.bf16.msra.mxu0 %v305
    %1207 = vmatpush.bf16.msra.mxu0 %v301
    %1208 = vmatpush.bf16.msra.mxu0 %v297
    %1209 = vmatpush.bf16.msra.mxu0 %v293
    %1210 = vmatmul.bf16.gmra.mxu0 %v1200
    %v1211 = vpop.f32.mrf.mxu0
    %v1212 = vadd.f32 0.0, %v1211
    %v1213 = vpop.f32.mrf.mxu0
    %1214 = vdwg.mxu0
    %1215 = vmatpush.bf16.msra.mxu0 %v322
    %1216 = vmatpush.bf16.msra.mxu0 %v318
    %1217 = vmatpush.bf16.msra.mxu0 %v314
    %1218 = vmatpush.bf16.msra.mxu0 %v310
    %1219 = vmatpush.bf16.msra.mxu0 %v306
    %1220 = vmatpush.bf16.msra.mxu0 %v302
    %1221 = vmatpush.bf16.msra.mxu0 %v298
    %1222 = vmatpush.bf16.msra.mxu0 %v294
    %1223 = vmatmul.bf16.gmra.mxu0 %v1200
    %v1224 = vpop.f32.mrf.mxu0
    %v1225 = vadd.f32 0.0, %v1224
    %v1226 = vpop.f32.mrf.mxu0
    %1227 = vdwg.mxu0
    %1228 = vmatpush.bf16.msra.mxu0 %v323
    %1229 = vmatpush.bf16.msra.mxu0 %v319
    %1230 = vmatpush.bf16.msra.mxu0 %v315
    %1231 = vmatpush.bf16.msra.mxu0 %v311
    %1232 = vmatpush.bf16.msra.mxu0 %v307
    %1233 = vmatpush.bf16.msra.mxu0 %v303
    %1234 = vmatpush.bf16.msra.mxu0 %v299
    %1235 = vmatpush.bf16.msra.mxu0 %v295
    %1236 = vmatmul.bf16.gmra.mxu0 %v1200
    %v1237 = vpop.f32.mrf.mxu0
    %v1238 = vadd.f32 0.0, %v1237
    %v1239 = vpop.f32.mrf.mxu0
    %1240 = vdwg.mxu0
    %1241 = vmatpush.bf16.msra.mxu0 %v324
    %1242 = vmatpush.bf16.msra.mxu0 %v320
    %1243 = vmatpush.bf16.msra.mxu0 %v316
    %1244 = vmatpush.bf16.msra.mxu0 %v312
    %1245 = vmatpush.bf16.msra.mxu0 %v308
    %1246 = vmatpush.bf16.msra.mxu0 %v304
    %1247 = vmatpush.bf16.msra.mxu0 %v300
    %1248 = vmatpush.bf16.msra.mxu0 %v296
    %1249 = vmatmul.bf16.gmra.mxu0 %v1200
    %v1250 = vpop.f32.mrf.mxu0
    %v1251 = vadd.f32 0.0, %v1250
    %v1252 = vpop.f32.mrf.mxu0
    %1253 = vdwg.mxu0
    %v1258 = vrot.slane %v1212, 4
    %v1259 = vrot.slane %v1225, 4
    %v1260 = vrot.slane %v1238, 4
    %v1261 = vrot.slane %v1251, 4
    %v1266 = vadd.f32 %v1194, %v1258
    %v1267 = vadd.f32 %v1195, %v1259
    %v1268 = vadd.f32 %v1196, %v1260
    %v1269 = vadd.f32 %v1197, %v1261
    %v1270 = vxor.u32 %v1266, 2147483648
    %v1271 = vxor.u32 %v1267, 2147483648
    %v1272 = vxor.u32 %v1268, 2147483648
    %v1273 = vmul.f32 %v1270, 1.442695
    %v1274 = vpow.pop %v1273
    %v1275 = vmul.f32 %v1271, 1.442695
    %v1276 = vpow.pop %v1275
    %v1277 = vmul.f32 %v1272, 1.442695
    %v1278 = vpow.pop %v1277
    %v1279 = vadd.f32 %v1274, 1.0
    %v1280 = vadd.f32 %v1276, 1.0
    %v1281 = vadd.f32 %v1278, 1.0
    %v1282 = vrcp.pop %v1279
    %v1283 = vmul.f32 %v1279, %v1282
    %v1284 = vsub.f32 1.0, %v1283
    %v1285 = vmul.f32 %v1282, %v1284
    %v1286 = vadd.f32 %v1282, %v1285
    %vm1287 = vweird.f32 %v1279
    %vm1288 = vweird.f32 %v1282
    %vm1289 = vmor %vm1287, %vm1288
    %v1290 = vsel %vm1289, %v1282, %v1286
    %v1291 = vand.u32 2147483647, %v1279
    %vm1292 = vcmp.eq.f32.partialorder %v1291, 8.507059e+37
    %v1293 = vand.u32 %v1279, 2147483648
    %v1294 = vor.u32 1.1754944e-38, %v1293
    %v1295 = vsel %vm1292, %v1294, %v1290
    %v1296 = vmul.f32 1.0, %v1295
    %v1297 = vrcp.pop %v1280
    %v1298 = vmul.f32 %v1280, %v1297
    %v1299 = vsub.f32 1.0, %v1298
    %v1300 = vmul.f32 %v1297, %v1299
    %v1301 = vadd.f32 %v1297, %v1300
    %vm1302 = vweird.f32 %v1280
    %vm1303 = vweird.f32 %v1297
    %vm1304 = vmor %vm1302, %vm1303
    %v1305 = vsel %vm1304, %v1297, %v1301
    %v1306 = vand.u32 2147483647, %v1280
    %vm1307 = vcmp.eq.f32.partialorder %v1306, 8.507059e+37
    %v1308 = vand.u32 %v1280, 2147483648
    %v1309 = vor.u32 1.1754944e-38, %v1308
    %v1310 = vsel %vm1307, %v1309, %v1305
    %v1311 = vmul.f32 1.0, %v1310
    %v1312 = vrcp.pop %v1281
    %v1313 = vmul.f32 %v1281, %v1312
    %v1314 = vsub.f32 1.0, %v1313
    %v1315 = vmul.f32 %v1312, %v1314
    %v1316 = vadd.f32 %v1312, %v1315
    %vm1317 = vweird.f32 %v1281
    %vm1318 = vweird.f32 %v1312
    %vm1319 = vmor %vm1317, %vm1318
    %v1320 = vsel %vm1319, %v1312, %v1316
    %v1321 = vand.u32 2147483647, %v1281
    %vm1322 = vcmp.eq.f32.partialorder %v1321, 8.507059e+37
    %v1323 = vand.u32 %v1281, 2147483648
    %v1324 = vor.u32 1.1754944e-38, %v1323
    %v1325 = vsel %vm1322, %v1324, %v1320
    %v1326 = vmul.f32 1.0, %v1325
    %v1327 = vtanh.pop %v1269
    %v1329 = vrot.slane %v1185, 6
    %v1331 = vmul.f32 %v1311, %v1329
    %v1332 = vmul.f32 %v1296, %v1327
    %v1333 = vadd.f32 %v1331, %v1332
    %v1334 = vtanh.pop %v1333
    %v1335 = vmul.f32 %v1326, %v1334
    %1337 = vst.sshfl [vmem:[#allocation1] sm:$0xff pattern:$0x73625140] %v1335
    %s1338 = scalar_lea.vmem [#allocation1], 2
    %v1339 = vld [vmem:[%s1338] ss:$4 sm:$0xff]
    %1341 = vst [vmem:[#allocation8 + $0xc] sm:$0x3] %v1339
    %v1342 = vld [vmem:[#allocation2 + $0x20] sm:$0xc0]
    %v1343 = vld [vmem:[#allocation2 + $0x28] sm:$0xc0]
    %v1344 = vld [vmem:[#allocation2 + $0x30] sm:$0xc0]
    %v1345 = vld [vmem:[#allocation2 + $0x38] sm:$0xc0]
    %v1346 = vpack.c.bf16 %v1335, %v1335
    %v1348 = vrot.slane %v1346, 2
    %1350 = vmatpush.bf16.msra.mxu0 %v321
    %1351 = vmatpush.bf16.msra.mxu0 %v317
    %1352 = vmatpush.bf16.msra.mxu0 %v313
    %1353 = vmatpush.bf16.msra.mxu0 %v309
    %1354 = vmatpush.bf16.msra.mxu0 %v305
    %1355 = vmatpush.bf16.msra.mxu0 %v301
    %1356 = vmatpush.bf16.msra.mxu0 %v297
    %1357 = vmatpush.bf16.msra.mxu0 %v293
    %1358 = vmatmul.bf16.gmra.mxu0 %v1348
    %v1359 = vpop.f32.mrf.mxu0
    %v1360 = vadd.f32 0.0, %v1359
    %v1361 = vpop.f32.mrf.mxu0
    %1362 = vdwg.mxu0
    %1363 = vmatpush.bf16.msra.mxu0 %v322
    %1364 = vmatpush.bf16.msra.mxu0 %v318
    %1365 = vmatpush.bf16.msra.mxu0 %v314
    %1366 = vmatpush.bf16.msra.mxu0 %v310
    %1367 = vmatpush.bf16.msra.mxu0 %v306
    %1368 = vmatpush.bf16.msra.mxu0 %v302
    %1369 = vmatpush.bf16.msra.mxu0 %v298
    %1370 = vmatpush.bf16.msra.mxu0 %v294
    %1371 = vmatmul.bf16.gmra.mxu0 %v1348
    %v1372 = vpop.f32.mrf.mxu0
    %v1373 = vadd.f32 0.0, %v1372
    %v1374 = vpop.f32.mrf.mxu0
    %1375 = vdwg.mxu0
    %1376 = vmatpush.bf16.msra.mxu0 %v323
    %1377 = vmatpush.bf16.msra.mxu0 %v319
    %1378 = vmatpush.bf16.msra.mxu0 %v315
    %1379 = vmatpush.bf16.msra.mxu0 %v311
    %1380 = vmatpush.bf16.msra.mxu0 %v307
    %1381 = vmatpush.bf16.msra.mxu0 %v303
    %1382 = vmatpush.bf16.msra.mxu0 %v299
    %1383 = vmatpush.bf16.msra.mxu0 %v295
    %1384 = vmatmul.bf16.gmra.mxu0 %v1348
    %v1385 = vpop.f32.mrf.mxu0
    %v1386 = vadd.f32 0.0, %v1385
    %v1387 = vpop.f32.mrf.mxu0
    %1388 = vdwg.mxu0
    %1389 = vmatpush.bf16.msra.mxu0 %v324
    %1390 = vmatpush.bf16.msra.mxu0 %v320
    %1391 = vmatpush.bf16.msra.mxu0 %v316
    %1392 = vmatpush.bf16.msra.mxu0 %v312
    %1393 = vmatpush.bf16.msra.mxu0 %v308
    %1394 = vmatpush.bf16.msra.mxu0 %v304
    %1395 = vmatpush.bf16.msra.mxu0 %v300
    %1396 = vmatpush.bf16.msra.mxu0 %v296
    %1397 = vmatmul.bf16.gmra.mxu0 %v1348
    %v1398 = vpop.f32.mrf.mxu0
    %v1399 = vadd.f32 0.0, %v1398
    %v1400 = vpop.f32.mrf.mxu0
    %1401 = vdwg.mxu0
    %v1406 = vrot.slane %v1360, 2
    %v1407 = vrot.slane %v1373, 2
    %v1408 = vrot.slane %v1386, 2
    %v1409 = vrot.slane %v1399, 2
    %v1414 = vadd.f32 %v1342, %v1406
    %v1415 = vadd.f32 %v1343, %v1407
    %v1416 = vadd.f32 %v1344, %v1408
    %v1417 = vadd.f32 %v1345, %v1409
    %v1418 = vxor.u32 %v1414, 2147483648
    %v1419 = vxor.u32 %v1415, 2147483648
    %v1420 = vxor.u32 %v1416, 2147483648
    %v1421 = vmul.f32 %v1418, 1.442695
    %v1422 = vpow.pop %v1421
    %v1423 = vmul.f32 %v1419, 1.442695
    %v1424 = vpow.pop %v1423
    %v1425 = vmul.f32 %v1420, 1.442695
    %v1426 = vpow.pop %v1425
    %v1427 = vadd.f32 %v1422, 1.0
    %v1428 = vadd.f32 %v1424, 1.0
    %v1429 = vadd.f32 %v1426, 1.0
    %v1430 = vrcp.pop %v1427
    %v1431 = vmul.f32 %v1427, %v1430
    %v1432 = vsub.f32 1.0, %v1431
    %v1433 = vmul.f32 %v1430, %v1432
    %v1434 = vadd.f32 %v1430, %v1433
    %vm1435 = vweird.f32 %v1427
    %vm1436 = vweird.f32 %v1430
    %vm1437 = vmor %vm1435, %vm1436
    %v1438 = vsel %vm1437, %v1430, %v1434
    %v1439 = vand.u32 2147483647, %v1427
    %vm1440 = vcmp.eq.f32.partialorder %v1439, 8.507059e+37
    %v1441 = vand.u32 %v1427, 2147483648
    %v1442 = vor.u32 1.1754944e-38, %v1441
    %v1443 = vsel %vm1440, %v1442, %v1438
    %v1444 = vmul.f32 1.0, %v1443
    %v1445 = vrcp.pop %v1428
    %v1446 = vmul.f32 %v1428, %v1445
    %v1447 = vsub.f32 1.0, %v1446
    %v1448 = vmul.f32 %v1445, %v1447
    %v1449 = vadd.f32 %v1445, %v1448
    %vm1450 = vweird.f32 %v1428
    %vm1451 = vweird.f32 %v1445
    %vm1452 = vmor %vm1450, %vm1451
    %v1453 = vsel %vm1452, %v1445, %v1449
    %v1454 = vand.u32 2147483647, %v1428
    %vm1455 = vcmp.eq.f32.partialorder %v1454, 8.507059e+37
    %v1456 = vand.u32 %v1428, 2147483648
    %v1457 = vor.u32 1.1754944e-38, %v1456
    %v1458 = vsel %vm1455, %v1457, %v1453
    %v1459 = vmul.f32 1.0, %v1458
    %v1460 = vrcp.pop %v1429
    %v1461 = vmul.f32 %v1429, %v1460
    %v1462 = vsub.f32 1.0, %v1461
    %v1463 = vmul.f32 %v1460, %v1462
    %v1464 = vadd.f32 %v1460, %v1463
    %vm1465 = vweird.f32 %v1429
    %vm1466 = vweird.f32 %v1460
    %vm1467 = vmor %vm1465, %vm1466
    %v1468 = vsel %vm1467, %v1460, %v1464
    %v1469 = vand.u32 2147483647, %v1429
    %vm1470 = vcmp.eq.f32.partialorder %v1469, 8.507059e+37
    %v1471 = vand.u32 %v1429, 2147483648
    %v1472 = vor.u32 1.1754944e-38, %v1471
    %v1473 = vsel %vm1470, %v1472, %v1468
    %v1474 = vmul.f32 1.0, %v1473
    %v1475 = vtanh.pop %v1417
    %v1477 = vrot.slane %v1333, 6
    %v1479 = vmul.f32 %v1459, %v1477
    %v1480 = vmul.f32 %v1444, %v1475
    %v1481 = vadd.f32 %v1479, %v1480
    %v1482 = vtanh.pop %v1481
    %v1483 = vmul.f32 %v1474, %v1482
    %1485 = vst.sshfl [vmem:[#allocation1] sm:$0xff pattern:$0x73625140] %v1483
    %s1486 = scalar_lea.vmem [#allocation1], 3
    %v1487 = vld [vmem:[%s1486] ss:$4 sm:$0xff]
    %1489 = vst [vmem:[#allocation8 + $0xe] sm:$0x3] %v1487
    %v1490 = vpack.c.bf16 %v1483, %v1483
    %v1491 = vld [vmem:[#allocation6] sm:$0xf]
    %v1492 = vld [vmem:[#allocation6 + $0x4] sm:$0xf]
    %v1493 = vld [vmem:[#allocation6 + $0x8] sm:$0xf]
    %v1494 = vld [vmem:[#allocation6 + $0xc] sm:$0xf]
    %v1495 = vld [vmem:[#allocation6 + $0x10] sm:$0xf]
    %v1496 = vld [vmem:[#allocation6 + $0x14] sm:$0xf]
    %v1497 = vld [vmem:[#allocation6 + $0x18] sm:$0xf]
    %v1498 = vld [vmem:[#allocation6 + $0x1c] sm:$0xf]
    %v1499 = vld [vmem:[#allocation6 + $0x20] sm:$0xf]
    %v1500 = vld [vmem:[#allocation6 + $0x24] sm:$0xf]
    %v1501 = vld [vmem:[#allocation6 + $0x28] sm:$0xf]
    %v1502 = vld [vmem:[#allocation6 + $0x2c] sm:$0xf]
    %v1503 = vld [vmem:[#allocation6 + $0x30] sm:$0xf]
    %v1504 = vld [vmem:[#allocation6 + $0x34] sm:$0xf]
    %v1505 = vld [vmem:[#allocation6 + $0x38] sm:$0xf]
    %v1506 = vld [vmem:[#allocation6 + $0x3c] sm:$0xf]
    %v1507 = vld [vmem:[%s5] sm:$0x1]
    %v1509 = vperm.slane %v1507, 0
    %v1512 = vrot.slane %v1490, 3
    %v1530 = vunpack.c.l.b16 %v1491
    %v1531 = vunpack.c.l.b16 %v1492
    %v1532 = vunpack.c.l.b16 %v1493
    %v1533 = vunpack.c.l.b16 %v1494
    %v1534 = vunpack.c.l.b16 %v1495
    %v1535 = vunpack.c.l.b16 %v1496
    %v1536 = vunpack.c.l.b16 %v1497
    %v1537 = vunpack.c.l.b16 %v1498
    %v1538 = vunpack.c.l.b16 %v1499
    %v1539 = vunpack.c.l.b16 %v1500
    %v1540 = vunpack.c.l.b16 %v1501
    %v1541 = vunpack.c.l.b16 %v1502
    %v1542 = vunpack.c.l.b16 %v1503
    %v1543 = vunpack.c.l.b16 %v1504
    %v1544 = vunpack.c.l.b16 %v1505
    %v1545 = vunpack.c.l.b16 %v1506
    %v1546 = vpack.c.b16 %v1531, %v1530
    %v1547 = vpack.c.b16 %v1533, %v1532
    %v1548 = vpack.c.b16 %v1535, %v1534
    %v1549 = vpack.c.b16 %v1537, %v1536
    %v1550 = vpack.c.b16 %v1539, %v1538
    %v1551 = vpack.c.b16 %v1541, %v1540
    %v1552 = vpack.c.b16 %v1543, %v1542
    %v1553 = vpack.c.b16 %v1545, %v1544
    %1562 = vmatpush.bf16.msra.mxu0 %v1553
    %1563 = vmatpush.bf16.msra.mxu0 %v1552
    %1564 = vmatpush.bf16.msra.mxu0 %v1551
    %1565 = vmatpush.bf16.msra.mxu0 %v1550
    %1566 = vmatpush.bf16.msra.mxu0 %v1549
    %1567 = vmatpush.bf16.msra.mxu0 %v1548
    %1568 = vmatpush.bf16.msra.mxu0 %v1547
    %1569 = vmatpush.bf16.msra.mxu0 %v1546
    %1570 = vmatmul.bf16.gmra.mxu0 %v1512
    %v1571 = vpop.f32.mrf.mxu0
    %v1572 = vadd.f32 %v1509, %v1571
    %v1573 = vpop.f32.mrf.mxu0
    %1574 = vdwg.mxu0
    %1575 = vst [vmem:[#allocation9] sm:$0x3] %v1572
    // Predicated region
    $region34: #{tpu_custom_call.1} parent=1 // pred_check
      _
    $region35: #{tpu_custom_call.1} parent=1 // pred_check_branch
      %1577 = sbr.rel (0) target = $region37
    $region36: #{tpu_custom_call.1} parent=1 // pred_region
      %1579 = vsyncadd [#allocation5], 0
      %s1581 = sshll.u32 [#allocation8], 4
      %s1582 = int_to_ptr.vmem [resolvable:$true] %s1581
      %s1583 = sshll.u32 %s6, 4
      %s1584 = int_to_ptr.hbm [resolvable:$true] %s1583
      %1586 = dma.vmem_to_hbm [thread:$0]  %s1582, 256, %s1584, [#allocation5]
    $region37: #{tpu_custom_call.1} parent=1 // pred_fallthru
      _
    // Predicated region
    $region38: #{tpu_custom_call.1} parent=1 // pred_check
      _
    $region39: #{tpu_custom_call.1} parent=1 // pred_check_branch
      %1588 = sbr.rel (0) target = $region41
    $region40: #{tpu_custom_call.1} parent=1 // pred_region
      %1590 = vsyncadd [#allocation10], 0
      %s1592 = sshll.u32 [#allocation9], 4
      %s1593 = int_to_ptr.vmem [resolvable:$true] %s1592
      %s1594 = sshll.u32 %s7, 4
      %s1595 = int_to_ptr.hbm [resolvable:$true] %s1594
      %1597 = dma.vmem_to_hbm [thread:$0]  %s1593, 32, %s1595, [#allocation10]
    $region41: #{tpu_custom_call.1} parent=1 // pred_fallthru
      _
    // Predicated region
    $region42: #{tpu_custom_call.1} parent=1 // pred_check
      _
    $region43: #{tpu_custom_call.1} parent=1 // pred_check_branch
      %1599 = sbr.rel (0) target = $region45
    $region44: #{tpu_custom_call.1} parent=1 // pred_region
      %1601 = dma.done [#allocation5], 256
    $region45: #{tpu_custom_call.1} parent=1 // pred_fallthru
      _
    // Predicated region
    $region46: #{tpu_custom_call.1} parent=1 // pred_check
      _
    $region47: #{tpu_custom_call.1} parent=1 // pred_check_branch
      %1603 = sbr.rel (0) target = $region49
    $region48: #{tpu_custom_call.1} parent=1 // pred_region
      %1605 = dma.done [#allocation10], 32
    $region49: #{tpu_custom_call.1} parent=1 // pred_fallthru
      _
    %1606 = vsyncpa [#allocation4], 1
    %1607 = vsyncpa [#allocation7], 1
    %1608 = vsyncpa [#allocation5], 1
    %1609 = vsyncpa [#allocation10], 1

</llo_original>
